<compile_context>
chip_gen: v7x
topology: tpu7x:2x2x1
jax: 0.10.0
libtpu: 0.0.40
codegen_flags: <defaults>
</compile_context>

<pallas_src>
import jax
import jax.numpy as jnp
from jax.experimental import pallas as pl
from jax.experimental.pallas import tpu as pltpu
import numpy as np

# ---- model hyper-params (small shapes consistent with the module) ----------
B = 2          # batch
C_IN = 3       # Conv2d(in_channels=3, ...)
H = W = 16     # small spatial size; same derivation as the module's 224 case
C_OUT = 2      # Conv2d(..., out_channels=2)
KH = KW = 3    # kernel_size=3, stride=1, padding=0
HO = (H - KH) // 1 + 1          # 14
WO = (W - KW) // 1 + 1          # 14
F = C_OUT * HO * WO             # 392  == int(((H-3)/1 + 1)^2 * 2)
N_OUT = 1000                    # Linear(..., 1000)

F_ROW = HO * W                  # 224: per-channel activation row, W-padded
K_LIN = C_OUT * F_ROW           # 448: merged (zero-row padded) reduction dim
XPAD = 384                      # padded flattened-spatial length (>= 34+224)


# ---------------------------- fused Pallas kernel ----------------------------
def fused_forward_kernel(xp_ref, cw_ref, cb_ref, lw_ref, lb_ref, o_ref, act_ref):
    """Conv2d(3->2,k3,valid)+ReLU -> flatten -> Linear(392->1000)+ReLU, fused.

    xp_ref : (C_IN, B, XPAD) f32 VMEM   lane-dense flattened, zero-padded images
    cw_ref : (C_OUT*C_IN*KH*KW,) f32 SMEM  flattened conv weight (scalar reads)
    cb_ref : (C_OUT,) f32 SMEM
    lw_ref : (K_LIN, N_OUT) f32 VMEM    pre-transposed, zero-row-padded Linear W
    lb_ref : (1, N_OUT) f32 VMEM
    o_ref  : (B, N_OUT) f32 VMEM
    act_ref: (B, K_LIN) f32 VMEM scratch (assembled conv activations)
    """
    # ---- stage 1: conv + bias + ReLU on lane-dense (B, F_ROW) slabs --------
    # out[b, co, ho*W + wo] accumulates w[co,ci,kh,kw] * x[b,ci,ho+kh,wo+kw];
    # every tap is a full-width shifted slice of the flattened image, shared
    # across both output channels.  Accumulation stays in vregs.
    acc = [jnp.zeros((B, F_ROW), dtype=jnp.float32) for _ in range(C_OUT)]
    for ci in range(C_IN):
        xc = xp_ref[ci]                                        # (B, XPAD)
        for kh in range(KH):
            for kw in range(KW):
                s = kh * W + kw
                xs = xc[:, s:s + F_ROW]                        # (B, F_ROW)
                for co in range(C_OUT):
                    wv = cw_ref[((co * C_IN + ci) * KH + kh) * KW + kw]
                    acc[co] = acc[co] + xs * wv

    # conv bias + ReLU, written once into the merged activation scratch.
    # Columns with wo >= WO hold junk (shifted reads / zero pad), but the
    # matching rows of lw_ref are zero, so they contribute nothing to the dot.
    for co in range(C_OUT):
        act_ref[:, co * F_ROW:(co + 1) * F_ROW] = jnp.maximum(
            acc[co] + cb_ref[co], 0.0)

    # ---- stage 2: single Linear dot + bias + ReLU on the MXU ---------------
    y = jnp.dot(act_ref[...], lw_ref[...], preferred_element_type=jnp.float32)
    o_ref[...] = jnp.maximum(y + lb_ref[...], 0.0)


# ------------------------------ wrappers -------------------------------------
def prepare_params(conv_w, conv_b, lin_w, lin_b):
    """One-time (outside jit) parameter re-layout.

    - conv weight flattened for SMEM scalar indexing.
    - linear weight transposed ONCE (no lin_w.T inside jit) and reordered to a
      single merged (C_OUT*HO*W, N_OUT) slab with zero rows for the padded
      wo >= WO columns, so the kernel's padded activation layout is
      numerically exact with exactly one MXU dot.
    # TODO(synk): storing lin_w in bf16 would halve the dominant HBM read on
    # v5e/v6e; kept f32 here to preserve the module's f32 numerics exactly.
    """
    w_t = lin_w.T.reshape(C_OUT, HO, WO, N_OUT)                # (2,14,14,1000)
    w_pad = jnp.pad(w_t, ((0, 0), (0, 0), (0, W - WO), (0, 0)))  # (2,14,16,1000)
    lin_w_merged = w_pad.reshape(K_LIN, N_OUT)                 # (448,1000)
    return (conv_w.reshape(-1), conv_b, lin_w_merged, lin_b.reshape(1, N_OUT))


@jax.jit
def my_model_forward(x, conv_w_flat, conv_b, lin_w_merged, lin_b_2d):
    # tiny layout plumbing (~9 KB): NCHW -> (C_IN, B, H*W), zero-pad lanes so
    # shifted conv-tap slices never read out of bounds.
    xp = jnp.transpose(x, (1, 0, 2, 3)).reshape(C_IN, B, H * W)
    xp = jnp.pad(xp, ((0, 0), (0, 0), (0, XPAD - H * W)))

    # Single fused kernel, no grid: total VMEM footprint (< 2 MB) fits on all
    # generations, and the wall time is bound by the one-shot weight DMA.
    return pl.pallas_call(
        fused_forward_kernel,
        out_shape=jax.ShapeDtypeStruct((B, N_OUT), jnp.float32),
        in_specs=[
            pl.BlockSpec(memory_space=pltpu.MemorySpace.VMEM),   # xp
            pl.BlockSpec(memory_space=pltpu.MemorySpace.SMEM),   # conv_w flat
            pl.BlockSpec(memory_space=pltpu.MemorySpace.SMEM),   # conv_b
            pl.BlockSpec(memory_space=pltpu.MemorySpace.VMEM),   # lin_w merged
            pl.BlockSpec(memory_space=pltpu.MemorySpace.VMEM),   # lin_b
        ],
        out_specs=pl.BlockSpec(memory_space=pltpu.MemorySpace.VMEM),
        scratch_shapes=[pltpu.VMEM((B, K_LIN), jnp.float32)],    # activations
    )(xp, conv_w_flat, conv_b, lin_w_merged, lin_b_2d)


# ------------------------- pure-JAX reference --------------------------------
def reference_forward(x, conv_w, conv_b, lin_w, lin_b):
    y = jax.lax.conv_general_dilated(
        x, conv_w, window_strides=(1, 1), padding="VALID",
        dimension_numbers=("NCHW", "OIHW", "NCHW"))
    y = y + conv_b.reshape(1, C_OUT, 1, 1)
    y = jnp.maximum(y, 0.0)
    y = y.reshape(B, -1)
    y = y @ lin_w.T + lin_b
    return jnp.maximum(y, 0.0)


# -------------------------------- main ----------------------------------------
if __name__ == "__main__":
    key = jax.random.PRNGKey(0)
    k_x, k_cw, k_cb, k_lw, k_lb = jax.random.split(key, 5)

    # deterministic parameter init (uniform, PyTorch-style fan-in bound)
    conv_bound = 1.0 / np.sqrt(C_IN * KH * KW)
    lin_bound = 1.0 / np.sqrt(F)
    x = jax.random.normal(k_x, (B, C_IN, H, W), dtype=jnp.float32)
    conv_w = jax.random.uniform(k_cw, (C_OUT, C_IN, KH, KW), jnp.float32,
                                -conv_bound, conv_bound)
    conv_b = jax.random.uniform(k_cb, (C_OUT,), jnp.float32,
                                -conv_bound, conv_bound)
    lin_w = jax.random.uniform(k_lw, (N_OUT, F), jnp.float32,
                               -lin_bound, lin_bound)
    lin_b = jax.random.uniform(k_lb, (N_OUT,), jnp.float32,
                               -lin_bound, lin_bound)

    # one-time weight re-layout (kept out of the per-call jitted path)
    params = jax.block_until_ready(prepare_params(conv_w, conv_b, lin_w, lin_b))

    out = my_model_forward(x, *params)
    out = jax.block_until_ready(out)

    ref = reference_forward(x, conv_w, conv_b, lin_w, lin_b)
    assert out.shape == (B, N_OUT)
    np.testing.assert_allclose(np.asarray(out), np.asarray(ref),
                               rtol=1e-3, atol=1e-3)
    print("KERNEL_OK")
</pallas_src>

<mosaic_0001>
module attributes {stable_mosaic.version = 11 : i64} {
  func.func @fused_forward_kernel(%arg0: memref<3x2x384xf32, #tpu.memory_space<vmem>>, %arg1: memref<54xf32, #tpu.memory_space<smem>>, %arg2: memref<2xf32, #tpu.memory_space<smem>>, %arg3: memref<448x1000xf32, #tpu.memory_space<vmem>>, %arg4: memref<1x1000xf32, #tpu.memory_space<vmem>>, %arg5: memref<2x1000xf32, #tpu.memory_space<vmem>>, %arg6: memref<2x448xf32, #tpu.memory_space<vmem>>) attributes {dimension_semantics = [], scalar_prefetch = 0 : i64, scratch_operands = 1 : i64, tpu.core_type = #tpu.core_type<tc>} {
    %cst = arith.constant 0.000000e+00 : f32
    %0 = vector.broadcast %cst : f32 to vector<2x224xf32>
    %cst_0 = arith.constant 0.000000e+00 : f32
    %1 = vector.broadcast %cst_0 : f32 to vector<2x224xf32>
    %c0 = arith.constant 0 : index
    %c0_1 = arith.constant 0 : index
    %c0_2 = arith.constant 0 : index
    %2 = vector.load %arg0[%c0, %c0_1, %c0_2] : memref<3x2x384xf32, #tpu.memory_space<vmem>>, vector<1x2x384xf32>
    %3 = vector.shape_cast %2 : vector<1x2x384xf32> to vector<2x384xf32>
    %4 = vector.extract_strided_slice %3 {offsets = [0, 0], sizes = [2, 224], strides = [1, 1]} : vector<2x384xf32> to vector<2x224xf32>
    %c0_3 = arith.constant 0 : index
    %5 = memref.load %arg1[%c0_3] : memref<54xf32, #tpu.memory_space<smem>>
    %6 = vector.broadcast %5 : f32 to vector<2x224xf32>
    %7 = arith.mulf %4, %6 : vector<2x224xf32>
    %8 = arith.addf %0, %7 : vector<2x224xf32>
    %c27 = arith.constant 27 : index
    %9 = memref.load %arg1[%c27] : memref<54xf32, #tpu.memory_space<smem>>
    %10 = vector.broadcast %9 : f32 to vector<2x224xf32>
    %11 = arith.mulf %4, %10 : vector<2x224xf32>
    %12 = arith.addf %1, %11 : vector<2x224xf32>
    %13 = vector.extract_strided_slice %3 {offsets = [0, 1], sizes = [2, 224], strides = [1, 1]} : vector<2x384xf32> to vector<2x224xf32>
    %c1 = arith.constant 1 : index
    %14 = memref.load %arg1[%c1] : memref<54xf32, #tpu.memory_space<smem>>
    %15 = vector.broadcast %14 : f32 to vector<2x224xf32>
    %16 = arith.mulf %13, %15 : vector<2x224xf32>
    %17 = arith.addf %8, %16 : vector<2x224xf32>
    %c28 = arith.constant 28 : index
    %18 = memref.load %arg1[%c28] : memref<54xf32, #tpu.memory_space<smem>>
    %19 = vector.broadcast %18 : f32 to vector<2x224xf32>
    %20 = arith.mulf %13, %19 : vector<2x224xf32>
    %21 = arith.addf %12, %20 : vector<2x224xf32>
    %22 = vector.extract_strided_slice %3 {offsets = [0, 2], sizes = [2, 224], strides = [1, 1]} : vector<2x384xf32> to vector<2x224xf32>
    %c2 = arith.constant 2 : index
    %23 = memref.load %arg1[%c2] : memref<54xf32, #tpu.memory_space<smem>>
    %24 = vector.broadcast %23 : f32 to vector<2x224xf32>
    %25 = arith.mulf %22, %24 : vector<2x224xf32>
    %26 = arith.addf %17, %25 : vector<2x224xf32>
    %c29 = arith.constant 29 : index
    %27 = memref.load %arg1[%c29] : memref<54xf32, #tpu.memory_space<smem>>
    %28 = vector.broadcast %27 : f32 to vector<2x224xf32>
    %29 = arith.mulf %22, %28 : vector<2x224xf32>
    %30 = arith.addf %21, %29 : vector<2x224xf32>
    %31 = vector.extract_strided_slice %3 {offsets = [0, 16], sizes = [2, 224], strides = [1, 1]} : vector<2x384xf32> to vector<2x224xf32>
    %c3 = arith.constant 3 : index
    %32 = memref.load %arg1[%c3] : memref<54xf32, #tpu.memory_space<smem>>
    %33 = vector.broadcast %32 : f32 to vector<2x224xf32>
    %34 = arith.mulf %31, %33 : vector<2x224xf32>
    %35 = arith.addf %26, %34 : vector<2x224xf32>
    %c30 = arith.constant 30 : index
    %36 = memref.load %arg1[%c30] : memref<54xf32, #tpu.memory_space<smem>>
    %37 = vector.broadcast %36 : f32 to vector<2x224xf32>
    %38 = arith.mulf %31, %37 : vector<2x224xf32>
    %39 = arith.addf %30, %38 : vector<2x224xf32>
    %40 = vector.extract_strided_slice %3 {offsets = [0, 17], sizes = [2, 224], strides = [1, 1]} : vector<2x384xf32> to vector<2x224xf32>
    %c4 = arith.constant 4 : index
    %41 = memref.load %arg1[%c4] : memref<54xf32, #tpu.memory_space<smem>>
    %42 = vector.broadcast %41 : f32 to vector<2x224xf32>
    %43 = arith.mulf %40, %42 : vector<2x224xf32>
    %44 = arith.addf %35, %43 : vector<2x224xf32>
    %c31 = arith.constant 31 : index
    %45 = memref.load %arg1[%c31] : memref<54xf32, #tpu.memory_space<smem>>
    %46 = vector.broadcast %45 : f32 to vector<2x224xf32>
    %47 = arith.mulf %40, %46 : vector<2x224xf32>
    %48 = arith.addf %39, %47 : vector<2x224xf32>
    %49 = vector.extract_strided_slice %3 {offsets = [0, 18], sizes = [2, 224], strides = [1, 1]} : vector<2x384xf32> to vector<2x224xf32>
    %c5 = arith.constant 5 : index
    %50 = memref.load %arg1[%c5] : memref<54xf32, #tpu.memory_space<smem>>
    %51 = vector.broadcast %50 : f32 to vector<2x224xf32>
    %52 = arith.mulf %49, %51 : vector<2x224xf32>
    %53 = arith.addf %44, %52 : vector<2x224xf32>
    %c32 = arith.constant 32 : index
    %54 = memref.load %arg1[%c32] : memref<54xf32, #tpu.memory_space<smem>>
    %55 = vector.broadcast %54 : f32 to vector<2x224xf32>
    %56 = arith.mulf %49, %55 : vector<2x224xf32>
    %57 = arith.addf %48, %56 : vector<2x224xf32>
    %58 = vector.extract_strided_slice %3 {offsets = [0, 32], sizes = [2, 224], strides = [1, 1]} : vector<2x384xf32> to vector<2x224xf32>
    %c6 = arith.constant 6 : index
    %59 = memref.load %arg1[%c6] : memref<54xf32, #tpu.memory_space<smem>>
    %60 = vector.broadcast %59 : f32 to vector<2x224xf32>
    %61 = arith.mulf %58, %60 : vector<2x224xf32>
    %62 = arith.addf %53, %61 : vector<2x224xf32>
    %c33 = arith.constant 33 : index
    %63 = memref.load %arg1[%c33] : memref<54xf32, #tpu.memory_space<smem>>
    %64 = vector.broadcast %63 : f32 to vector<2x224xf32>
    %65 = arith.mulf %58, %64 : vector<2x224xf32>
    %66 = arith.addf %57, %65 : vector<2x224xf32>
    %67 = vector.extract_strided_slice %3 {offsets = [0, 33], sizes = [2, 224], strides = [1, 1]} : vector<2x384xf32> to vector<2x224xf32>
    %c7 = arith.constant 7 : index
    %68 = memref.load %arg1[%c7] : memref<54xf32, #tpu.memory_space<smem>>
    %69 = vector.broadcast %68 : f32 to vector<2x224xf32>
    %70 = arith.mulf %67, %69 : vector<2x224xf32>
    %71 = arith.addf %62, %70 : vector<2x224xf32>
    %c34 = arith.constant 34 : index
    %72 = memref.load %arg1[%c34] : memref<54xf32, #tpu.memory_space<smem>>
    %73 = vector.broadcast %72 : f32 to vector<2x224xf32>
    %74 = arith.mulf %67, %73 : vector<2x224xf32>
    %75 = arith.addf %66, %74 : vector<2x224xf32>
    %76 = vector.extract_strided_slice %3 {offsets = [0, 34], sizes = [2, 224], strides = [1, 1]} : vector<2x384xf32> to vector<2x224xf32>
    %c8 = arith.constant 8 : index
    %77 = memref.load %arg1[%c8] : memref<54xf32, #tpu.memory_space<smem>>
    %78 = vector.broadcast %77 : f32 to vector<2x224xf32>
    %79 = arith.mulf %76, %78 : vector<2x224xf32>
    %80 = arith.addf %71, %79 : vector<2x224xf32>
    %c35 = arith.constant 35 : index
    %81 = memref.load %arg1[%c35] : memref<54xf32, #tpu.memory_space<smem>>
    %82 = vector.broadcast %81 : f32 to vector<2x224xf32>
    %83 = arith.mulf %76, %82 : vector<2x224xf32>
    %84 = arith.addf %75, %83 : vector<2x224xf32>
    %c1_4 = arith.constant 1 : index
    %c0_5 = arith.constant 0 : index
    %c0_6 = arith.constant 0 : index
    %85 = vector.load %arg0[%c1_4, %c0_5, %c0_6] : memref<3x2x384xf32, #tpu.memory_space<vmem>>, vector<1x2x384xf32>
    %86 = vector.shape_cast %85 : vector<1x2x384xf32> to vector<2x384xf32>
    %87 = vector.extract_strided_slice %86 {offsets = [0, 0], sizes = [2, 224], strides = [1, 1]} : vector<2x384xf32> to vector<2x224xf32>
    %c9 = arith.constant 9 : index
    %88 = memref.load %arg1[%c9] : memref<54xf32, #tpu.memory_space<smem>>
    %89 = vector.broadcast %88 : f32 to vector<2x224xf32>
    %90 = arith.mulf %87, %89 : vector<2x224xf32>
    %91 = arith.addf %80, %90 : vector<2x224xf32>
    %c36 = arith.constant 36 : index
    %92 = memref.load %arg1[%c36] : memref<54xf32, #tpu.memory_space<smem>>
    %93 = vector.broadcast %92 : f32 to vector<2x224xf32>
    %94 = arith.mulf %87, %93 : vector<2x224xf32>
    %95 = arith.addf %84, %94 : vector<2x224xf32>
    %96 = vector.extract_strided_slice %86 {offsets = [0, 1], sizes = [2, 224], strides = [1, 1]} : vector<2x384xf32> to vector<2x224xf32>
    %c10 = arith.constant 10 : index
    %97 = memref.load %arg1[%c10] : memref<54xf32, #tpu.memory_space<smem>>
    %98 = vector.broadcast %97 : f32 to vector<2x224xf32>
    %99 = arith.mulf %96, %98 : vector<2x224xf32>
    %100 = arith.addf %91, %99 : vector<2x224xf32>
    %c37 = arith.constant 37 : index
    %101 = memref.load %arg1[%c37] : memref<54xf32, #tpu.memory_space<smem>>
    %102 = vector.broadcast %101 : f32 to vector<2x224xf32>
    %103 = arith.mulf %96, %102 : vector<2x224xf32>
    %104 = arith.addf %95, %103 : vector<2x224xf32>
    %105 = vector.extract_strided_slice %86 {offsets = [0, 2], sizes = [2, 224], strides = [1, 1]} : vector<2x384xf32> to vector<2x224xf32>
    %c11 = arith.constant 11 : index
    %106 = memref.load %arg1[%c11] : memref<54xf32, #tpu.memory_space<smem>>
    %107 = vector.broadcast %106 : f32 to vector<2x224xf32>
    %108 = arith.mulf %105, %107 : vector<2x224xf32>
    %109 = arith.addf %100, %108 : vector<2x224xf32>
    %c38 = arith.constant 38 : index
    %110 = memref.load %arg1[%c38] : memref<54xf32, #tpu.memory_space<smem>>
    %111 = vector.broadcast %110 : f32 to vector<2x224xf32>
    %112 = arith.mulf %105, %111 : vector<2x224xf32>
    %113 = arith.addf %104, %112 : vector<2x224xf32>
    %114 = vector.extract_strided_slice %86 {offsets = [0, 16], sizes = [2, 224], strides = [1, 1]} : vector<2x384xf32> to vector<2x224xf32>
    %c12 = arith.constant 12 : index
    %115 = memref.load %arg1[%c12] : memref<54xf32, #tpu.memory_space<smem>>
    %116 = vector.broadcast %115 : f32 to vector<2x224xf32>
    %117 = arith.mulf %114, %116 : vector<2x224xf32>
    %118 = arith.addf %109, %117 : vector<2x224xf32>
    %c39 = arith.constant 39 : index
    %119 = memref.load %arg1[%c39] : memref<54xf32, #tpu.memory_space<smem>>
    %120 = vector.broadcast %119 : f32 to vector<2x224xf32>
    %121 = arith.mulf %114, %120 : vector<2x224xf32>
    %122 = arith.addf %113, %121 : vector<2x224xf32>
    %123 = vector.extract_strided_slice %86 {offsets = [0, 17], sizes = [2, 224], strides = [1, 1]} : vector<2x384xf32> to vector<2x224xf32>
    %c13 = arith.constant 13 : index
    %124 = memref.load %arg1[%c13] : memref<54xf32, #tpu.memory_space<smem>>
    %125 = vector.broadcast %124 : f32 to vector<2x224xf32>
    %126 = arith.mulf %123, %125 : vector<2x224xf32>
    %127 = arith.addf %118, %126 : vector<2x224xf32>
    %c40 = arith.constant 40 : index
    %128 = memref.load %arg1[%c40] : memref<54xf32, #tpu.memory_space<smem>>
    %129 = vector.broadcast %128 : f32 to vector<2x224xf32>
    %130 = arith.mulf %123, %129 : vector<2x224xf32>
    %131 = arith.addf %122, %130 : vector<2x224xf32>
    %132 = vector.extract_strided_slice %86 {offsets = [0, 18], sizes = [2, 224], strides = [1, 1]} : vector<2x384xf32> to vector<2x224xf32>
    %c14 = arith.constant 14 : index
    %133 = memref.load %arg1[%c14] : memref<54xf32, #tpu.memory_space<smem>>
    %134 = vector.broadcast %133 : f32 to vector<2x224xf32>
    %135 = arith.mulf %132, %134 : vector<2x224xf32>
    %136 = arith.addf %127, %135 : vector<2x224xf32>
    %c41 = arith.constant 41 : index
    %137 = memref.load %arg1[%c41] : memref<54xf32, #tpu.memory_space<smem>>
    %138 = vector.broadcast %137 : f32 to vector<2x224xf32>
    %139 = arith.mulf %132, %138 : vector<2x224xf32>
    %140 = arith.addf %131, %139 : vector<2x224xf32>
    %141 = vector.extract_strided_slice %86 {offsets = [0, 32], sizes = [2, 224], strides = [1, 1]} : vector<2x384xf32> to vector<2x224xf32>
    %c15 = arith.constant 15 : index
    %142 = memref.load %arg1[%c15] : memref<54xf32, #tpu.memory_space<smem>>
    %143 = vector.broadcast %142 : f32 to vector<2x224xf32>
    %144 = arith.mulf %141, %143 : vector<2x224xf32>
    %145 = arith.addf %136, %144 : vector<2x224xf32>
    %c42 = arith.constant 42 : index
    %146 = memref.load %arg1[%c42] : memref<54xf32, #tpu.memory_space<smem>>
    %147 = vector.broadcast %146 : f32 to vector<2x224xf32>
    %148 = arith.mulf %141, %147 : vector<2x224xf32>
    %149 = arith.addf %140, %148 : vector<2x224xf32>
    %150 = vector.extract_strided_slice %86 {offsets = [0, 33], sizes = [2, 224], strides = [1, 1]} : vector<2x384xf32> to vector<2x224xf32>
    %c16 = arith.constant 16 : index
    %151 = memref.load %arg1[%c16] : memref<54xf32, #tpu.memory_space<smem>>
    %152 = vector.broadcast %151 : f32 to vector<2x224xf32>
    %153 = arith.mulf %150, %152 : vector<2x224xf32>
    %154 = arith.addf %145, %153 : vector<2x224xf32>
    %c43 = arith.constant 43 : index
    %155 = memref.load %arg1[%c43] : memref<54xf32, #tpu.memory_space<smem>>
    %156 = vector.broadcast %155 : f32 to vector<2x224xf32>
    %157 = arith.mulf %150, %156 : vector<2x224xf32>
    %158 = arith.addf %149, %157 : vector<2x224xf32>
    %159 = vector.extract_strided_slice %86 {offsets = [0, 34], sizes = [2, 224], strides = [1, 1]} : vector<2x384xf32> to vector<2x224xf32>
    %c17 = arith.constant 17 : index
    %160 = memref.load %arg1[%c17] : memref<54xf32, #tpu.memory_space<smem>>
    %161 = vector.broadcast %160 : f32 to vector<2x224xf32>
    %162 = arith.mulf %159, %161 : vector<2x224xf32>
    %163 = arith.addf %154, %162 : vector<2x224xf32>
    %c44 = arith.constant 44 : index
    %164 = memref.load %arg1[%c44] : memref<54xf32, #tpu.memory_space<smem>>
    %165 = vector.broadcast %164 : f32 to vector<2x224xf32>
    %166 = arith.mulf %159, %165 : vector<2x224xf32>
    %167 = arith.addf %158, %166 : vector<2x224xf32>
    %c2_7 = arith.constant 2 : index
    %c0_8 = arith.constant 0 : index
    %c0_9 = arith.constant 0 : index
    %168 = vector.load %arg0[%c2_7, %c0_8, %c0_9] : memref<3x2x384xf32, #tpu.memory_space<vmem>>, vector<1x2x384xf32>
    %169 = vector.shape_cast %168 : vector<1x2x384xf32> to vector<2x384xf32>
    %170 = vector.extract_strided_slice %169 {offsets = [0, 0], sizes = [2, 224], strides = [1, 1]} : vector<2x384xf32> to vector<2x224xf32>
    %c18 = arith.constant 18 : index
    %171 = memref.load %arg1[%c18] : memref<54xf32, #tpu.memory_space<smem>>
    %172 = vector.broadcast %171 : f32 to vector<2x224xf32>
    %173 = arith.mulf %170, %172 : vector<2x224xf32>
    %174 = arith.addf %163, %173 : vector<2x224xf32>
    %c45 = arith.constant 45 : index
    %175 = memref.load %arg1[%c45] : memref<54xf32, #tpu.memory_space<smem>>
    %176 = vector.broadcast %175 : f32 to vector<2x224xf32>
    %177 = arith.mulf %170, %176 : vector<2x224xf32>
    %178 = arith.addf %167, %177 : vector<2x224xf32>
    %179 = vector.extract_strided_slice %169 {offsets = [0, 1], sizes = [2, 224], strides = [1, 1]} : vector<2x384xf32> to vector<2x224xf32>
    %c19 = arith.constant 19 : index
    %180 = memref.load %arg1[%c19] : memref<54xf32, #tpu.memory_space<smem>>
    %181 = vector.broadcast %180 : f32 to vector<2x224xf32>
    %182 = arith.mulf %179, %181 : vector<2x224xf32>
    %183 = arith.addf %174, %182 : vector<2x224xf32>
    %c46 = arith.constant 46 : index
    %184 = memref.load %arg1[%c46] : memref<54xf32, #tpu.memory_space<smem>>
    %185 = vector.broadcast %184 : f32 to vector<2x224xf32>
    %186 = arith.mulf %179, %185 : vector<2x224xf32>
    %187 = arith.addf %178, %186 : vector<2x224xf32>
    %188 = vector.extract_strided_slice %169 {offsets = [0, 2], sizes = [2, 224], strides = [1, 1]} : vector<2x384xf32> to vector<2x224xf32>
    %c20 = arith.constant 20 : index
    %189 = memref.load %arg1[%c20] : memref<54xf32, #tpu.memory_space<smem>>
    %190 = vector.broadcast %189 : f32 to vector<2x224xf32>
    %191 = arith.mulf %188, %190 : vector<2x224xf32>
    %192 = arith.addf %183, %191 : vector<2x224xf32>
    %c47 = arith.constant 47 : index
    %193 = memref.load %arg1[%c47] : memref<54xf32, #tpu.memory_space<smem>>
    %194 = vector.broadcast %193 : f32 to vector<2x224xf32>
    %195 = arith.mulf %188, %194 : vector<2x224xf32>
    %196 = arith.addf %187, %195 : vector<2x224xf32>
    %197 = vector.extract_strided_slice %169 {offsets = [0, 16], sizes = [2, 224], strides = [1, 1]} : vector<2x384xf32> to vector<2x224xf32>
    %c21 = arith.constant 21 : index
    %198 = memref.load %arg1[%c21] : memref<54xf32, #tpu.memory_space<smem>>
    %199 = vector.broadcast %198 : f32 to vector<2x224xf32>
    %200 = arith.mulf %197, %199 : vector<2x224xf32>
    %201 = arith.addf %192, %200 : vector<2x224xf32>
    %c48 = arith.constant 48 : index
    %202 = memref.load %arg1[%c48] : memref<54xf32, #tpu.memory_space<smem>>
    %203 = vector.broadcast %202 : f32 to vector<2x224xf32>
    %204 = arith.mulf %197, %203 : vector<2x224xf32>
    %205 = arith.addf %196, %204 : vector<2x224xf32>
    %206 = vector.extract_strided_slice %169 {offsets = [0, 17], sizes = [2, 224], strides = [1, 1]} : vector<2x384xf32> to vector<2x224xf32>
    %c22 = arith.constant 22 : index
    %207 = memref.load %arg1[%c22] : memref<54xf32, #tpu.memory_space<smem>>
    %208 = vector.broadcast %207 : f32 to vector<2x224xf32>
    %209 = arith.mulf %206, %208 : vector<2x224xf32>
    %210 = arith.addf %201, %209 : vector<2x224xf32>
    %c49 = arith.constant 49 : index
    %211 = memref.load %arg1[%c49] : memref<54xf32, #tpu.memory_space<smem>>
    %212 = vector.broadcast %211 : f32 to vector<2x224xf32>
    %213 = arith.mulf %206, %212 : vector<2x224xf32>
    %214 = arith.addf %205, %213 : vector<2x224xf32>
    %215 = vector.extract_strided_slice %169 {offsets = [0, 18], sizes = [2, 224], strides = [1, 1]} : vector<2x384xf32> to vector<2x224xf32>
    %c23 = arith.constant 23 : index
    %216 = memref.load %arg1[%c23] : memref<54xf32, #tpu.memory_space<smem>>
    %217 = vector.broadcast %216 : f32 to vector<2x224xf32>
    %218 = arith.mulf %215, %217 : vector<2x224xf32>
    %219 = arith.addf %210, %218 : vector<2x224xf32>
    %c50 = arith.constant 50 : index
    %220 = memref.load %arg1[%c50] : memref<54xf32, #tpu.memory_space<smem>>
    %221 = vector.broadcast %220 : f32 to vector<2x224xf32>
    %222 = arith.mulf %215, %221 : vector<2x224xf32>
    %223 = arith.addf %214, %222 : vector<2x224xf32>
    %224 = vector.extract_strided_slice %169 {offsets = [0, 32], sizes = [2, 224], strides = [1, 1]} : vector<2x384xf32> to vector<2x224xf32>
    %c24 = arith.constant 24 : index
    %225 = memref.load %arg1[%c24] : memref<54xf32, #tpu.memory_space<smem>>
    %226 = vector.broadcast %225 : f32 to vector<2x224xf32>
    %227 = arith.mulf %224, %226 : vector<2x224xf32>
    %228 = arith.addf %219, %227 : vector<2x224xf32>
    %c51 = arith.constant 51 : index
    %229 = memref.load %arg1[%c51] : memref<54xf32, #tpu.memory_space<smem>>
    %230 = vector.broadcast %229 : f32 to vector<2x224xf32>
    %231 = arith.mulf %224, %230 : vector<2x224xf32>
    %232 = arith.addf %223, %231 : vector<2x224xf32>
    %233 = vector.extract_strided_slice %169 {offsets = [0, 33], sizes = [2, 224], strides = [1, 1]} : vector<2x384xf32> to vector<2x224xf32>
    %c25 = arith.constant 25 : index
    %234 = memref.load %arg1[%c25] : memref<54xf32, #tpu.memory_space<smem>>
    %235 = vector.broadcast %234 : f32 to vector<2x224xf32>
    %236 = arith.mulf %233, %235 : vector<2x224xf32>
    %237 = arith.addf %228, %236 : vector<2x224xf32>
    %c52 = arith.constant 52 : index
    %238 = memref.load %arg1[%c52] : memref<54xf32, #tpu.memory_space<smem>>
    %239 = vector.broadcast %238 : f32 to vector<2x224xf32>
    %240 = arith.mulf %233, %239 : vector<2x224xf32>
    %241 = arith.addf %232, %240 : vector<2x224xf32>
    %242 = vector.extract_strided_slice %169 {offsets = [0, 34], sizes = [2, 224], strides = [1, 1]} : vector<2x384xf32> to vector<2x224xf32>
    %c26 = arith.constant 26 : index
    %243 = memref.load %arg1[%c26] : memref<54xf32, #tpu.memory_space<smem>>
    %244 = vector.broadcast %243 : f32 to vector<2x224xf32>
    %245 = arith.mulf %242, %244 : vector<2x224xf32>
    %246 = arith.addf %237, %245 : vector<2x224xf32>
    %c53 = arith.constant 53 : index
    %247 = memref.load %arg1[%c53] : memref<54xf32, #tpu.memory_space<smem>>
    %248 = vector.broadcast %247 : f32 to vector<2x224xf32>
    %249 = arith.mulf %242, %248 : vector<2x224xf32>
    %250 = arith.addf %241, %249 : vector<2x224xf32>
    %c0_10 = arith.constant 0 : index
    %251 = memref.load %arg2[%c0_10] : memref<2xf32, #tpu.memory_space<smem>>
    %252 = vector.broadcast %251 : f32 to vector<2x224xf32>
    %253 = arith.addf %246, %252 : vector<2x224xf32>
    %cst_11 = arith.constant 0.000000e+00 : f32
    %254 = vector.broadcast %cst_11 : f32 to vector<2x224xf32>
    %255 = arith.maximumf %253, %254 : vector<2x224xf32>
    %c0_12 = arith.constant 0 : index
    %c0_13 = arith.constant 0 : index
    %256 = vector.load %arg6[%c0_12, %c0_13] : memref<2x448xf32, #tpu.memory_space<vmem>>, vector<2x224xf32>
    tpu.vector_store %arg6[%c0_12, %c0_13], %255 {strides = array<i32>} : memref<2x448xf32, #tpu.memory_space<vmem>>, vector<2x224xf32>,
    %c1_14 = arith.constant 1 : index
    %257 = memref.load %arg2[%c1_14] : memref<2xf32, #tpu.memory_space<smem>>
    %258 = vector.broadcast %257 : f32 to vector<2x224xf32>
    %259 = arith.addf %250, %258 : vector<2x224xf32>
    %cst_15 = arith.constant 0.000000e+00 : f32
    %260 = vector.broadcast %cst_15 : f32 to vector<2x224xf32>
    %261 = arith.maximumf %259, %260 : vector<2x224xf32>
    %c0_16 = arith.constant 0 : index
    %c224 = arith.constant 224 : index
    %262 = vector.load %arg6[%c0_16, %c224] : memref<2x448xf32, #tpu.memory_space<vmem>>, vector<2x224xf32>
    tpu.vector_store %arg6[%c0_16, %c224], %261 {strides = array<i32>} : memref<2x448xf32, #tpu.memory_space<vmem>>, vector<2x224xf32>,
    %c0_17 = arith.constant 0 : index
    %c0_18 = arith.constant 0 : index
    %263 = vector.load %arg6[%c0_17, %c0_18] : memref<2x448xf32, #tpu.memory_space<vmem>>, vector<2x448xf32>
    %c0_19 = arith.constant 0 : index
    %c0_20 = arith.constant 0 : index
    %264 = vector.load %arg3[%c0_19, %c0_20] : memref<448x1000xf32, #tpu.memory_space<vmem>>, vector<448x1000xf32>
    %cst_21 = arith.constant dense<0.000000e+00> : vector<2x1000xf32>
    %265 = tpu.matmul %263, %264, %cst_21 {dimension_numbers = #tpu.dot_dimension_numbers<[1], [0], [0], [1], [0, 0, 1, 1], [], []>} : vector<2x448xf32>, vector<448x1000xf32>, vector<2x1000xf32> -> vector<2x1000xf32>
    %c0_22 = arith.constant 0 : index
    %c0_23 = arith.constant 0 : index
    %266 = vector.load %arg4[%c0_22, %c0_23] : memref<1x1000xf32, #tpu.memory_space<vmem>>, vector<1x1000xf32>
    %267 = vector.broadcast %266 : vector<1x1000xf32> to vector<2x1000xf32>
    %268 = arith.addf %265, %267 : vector<2x1000xf32>
    %cst_24 = arith.constant 0.000000e+00 : f32
    %269 = vector.broadcast %cst_24 : f32 to vector<2x1000xf32>
    %270 = arith.maximumf %268, %269 : vector<2x1000xf32>
    %c0_25 = arith.constant 0 : index
    %c0_26 = arith.constant 0 : index
    %271 = vector.load %arg5[%c0_25, %c0_26] : memref<2x1000xf32, #tpu.memory_space<vmem>>, vector<2x1000xf32>
    tpu.vector_store %arg5[%c0_25, %c0_26], %270 {strides = array<i32>} : memref<2x1000xf32, #tpu.memory_space<vmem>>, vector<2x1000xf32>,
    return
  }
}

</mosaic_0001>

<llo_original>
// kernel: my_model_forward.1
$region0: #{my_model_forward.1}
  #allocation0 [shape = 'u32[]', space=smem, size = 0x4, offset = 0x4, fixed_abs, tag = 'smem constant byte address 0x4 - core index']
  #allocation1 [shape = 'u32[144,128]{1,0:T(1,128)}', space=vmem, size = 0x12000, scoped, tag = 'internal scratch']
  #allocation2 [shape = 'f32[2,448]{1,0:T(2,128)}', space=vmem, size = 0x1000, scoped, tag = 'scratch operand']
  %s0 = inlined_call_operand.vmem [shape: f32[3,2,384], index: 0, kind: input, shape index: {}]
  %s1 = inlined_call_operand.hbm [shape: f32[54], index: 1, kind: input, shape index: {}]
  %s2 = inlined_call_operand.hbm [shape: f32[2], index: 2, kind: input, shape index: {}]
  %s3 = inlined_call_operand.hbm [shape: f32[448,1000], index: 3, kind: input, shape index: {}]
  %s4 = inlined_call_operand.hbm [shape: f32[1,1000], index: 4, kind: input, shape index: {}]
  %s5 = inlined_call_operand.hbm [shape: f32[2,1000], index: 5, kind: output, shape index: {}]
  %s6 = sld [smem:[#allocation0]]
  $region46: #{my_model_forward.1} parent=0
    _
  %s8 = ssub.s32 1, %s6
  %s9 = scalar_select 0, %s8, %s6
  $region1: #{my_model_forward.1} parent=0
    #allocation3 [shape = 'u8[512]{0}', space=smem, size = 0x200, scoped, tag = 'input window, operand 1, single buffered']
    #allocation4 [shape = 's32[1]{0}', space=sflag, size = 0x4, scoped, tag = 'scoped memory for my_model_forward.1']
    #allocation5 [shape = 's32[1]{0}', space=sflag, size = 0x4, scoped, tag = 'scoped memory for my_model_forward.1']
    #allocation6 [shape = 's32[1]{0}', space=sflag, size = 0x4, scoped, tag = 'scoped memory for my_model_forward.1']
    #allocation7 [shape = 'u8[512]{0}', space=smem, size = 0x200, scoped, tag = 'input window, operand 2, single buffered']
    #allocation8 [shape = 's32[1]{0}', space=sflag, size = 0x4, scoped, tag = 'scoped memory for my_model_forward.1']
    #allocation9 [shape = 'u8[1835008]{0}', space=vmem, size = 0x1c0000, scoped, tag = 'input window, operand 3, single buffered']
    #allocation10 [shape = 'u8[4096]{0}', space=vmem, size = 0x1000, scoped, tag = 'input window, operand 4, single buffered']
    #allocation11 [shape = 's32[1]{0}', space=sflag, size = 0x4, scoped, tag = 'scoped memory for my_model_forward.1']
    #allocation12 [shape = 'u8[8192]{0}', space=vmem, size = 0x2000, scoped, tag = 'output window, operand 0, single buffered']
    %10 = vsyncpa [#allocation6], 0
    %11 = vsyncpa [#allocation8], 0
    %12 = vsyncpa [#allocation4], 0
    %13 = vsyncpa [#allocation11], 0
    %14 = vsyncpa [#allocation5], 0
    // Predicated region
    $region2: #{my_model_forward.1} parent=1 // pred_check
      _
    $region3: #{my_model_forward.1} parent=1 // pred_check_branch
      %16 = sbr.rel (0) target = $region5
    $region4: #{my_model_forward.1} parent=1 // pred_region
      _
    $region5: #{my_model_forward.1} parent=1 // pred_fallthru
      _
    // Predicated region
    $region6: #{my_model_forward.1} parent=1 // pred_check
      _
    $region7: #{my_model_forward.1} parent=1 // pred_check_branch
      %18 = sbr.rel (0) target = $region9
    $region8: #{my_model_forward.1} parent=1 // pred_region
      %s20 = ssub.s32 16, 16
      %21 = vsyncadd [#allocation6], %s20
      %24 = dma.hbm_to_smem %s1, 16, [#allocation3], [#allocation6]
    $region9: #{my_model_forward.1} parent=1 // pred_fallthru
      _
    // Predicated region
    $region10: #{my_model_forward.1} parent=1 // pred_check
      _
    $region11: #{my_model_forward.1} parent=1 // pred_check_branch
      %26 = sbr.rel (0) target = $region13
    $region12: #{my_model_forward.1} parent=1 // pred_region
      %s28 = ssub.s32 16, 16
      %29 = vsyncadd [#allocation8], %s28
      %32 = dma.hbm_to_smem %s2, 16, [#allocation7], [#allocation8]
    $region13: #{my_model_forward.1} parent=1 // pred_fallthru
      _
    // Predicated region
    $region14: #{my_model_forward.1} parent=1 // pred_check
      _
    $region15: #{my_model_forward.1} parent=1 // pred_check_branch
      %34 = sbr.rel (0) target = $region17
    $region16: #{my_model_forward.1} parent=1 // pred_region
      %s36 = ssub.s32 57344, 57344
      %37 = vsyncadd [#allocation4], %s36
      %s38 = sshll.u32 [#allocation9], 4
      %s39 = int_to_ptr.vmem [resolvable:$true] %s38
      %44 = dma.hbm_to_vmem [thread:$0]  %s3, 57344, %s39, [#allocation4], 1024, 1024, 64
    $region17: #{my_model_forward.1} parent=1 // pred_fallthru
      _
    // Predicated region
    $region18: #{my_model_forward.1} parent=1 // pred_check
      _
    $region19: #{my_model_forward.1} parent=1 // pred_check_branch
      %46 = sbr.rel (0) target = $region21
    $region20: #{my_model_forward.1} parent=1 // pred_region
      %s48 = ssub.s32 128, 128
      %49 = vsyncadd [#allocation11], %s48
      %s51 = sshll.u32 [#allocation10], 4
      %s52 = int_to_ptr.vmem [resolvable:$true] %s51
      %54 = dma.hbm_to_vmem [thread:$0]  %s4, 128, %s52, [#allocation11]
    $region21: #{my_model_forward.1} parent=1 // pred_fallthru
      _
    // Predicated region
    $region22: #{my_model_forward.1} parent=1 // pred_check
      _
    $region23: #{my_model_forward.1} parent=1 // pred_check_branch
      %56 = sbr.rel (0) target = $region25
    $region24: #{my_model_forward.1} parent=1 // pred_region
      %57 = dma.done [#allocation6], 16
    $region25: #{my_model_forward.1} parent=1 // pred_fallthru
      _
    // Predicated region
    $region26: #{my_model_forward.1} parent=1 // pred_check
      _
    $region27: #{my_model_forward.1} parent=1 // pred_check_branch
      %59 = sbr.rel (0) target = $region29
    $region28: #{my_model_forward.1} parent=1 // pred_region
      %60 = dma.done [#allocation8], 16
    $region29: #{my_model_forward.1} parent=1 // pred_fallthru
      _
    // Predicated region
    $region30: #{my_model_forward.1} parent=1 // pred_check
      _
    $region31: #{my_model_forward.1} parent=1 // pred_check_branch
      %62 = sbr.rel (0) target = $region33
    $region32: #{my_model_forward.1} parent=1 // pred_region
      %63 = dma.done [#allocation4], 57344
    $region33: #{my_model_forward.1} parent=1 // pred_fallthru
      _
    // Predicated region
    $region34: #{my_model_forward.1} parent=1 // pred_check
      _
    $region35: #{my_model_forward.1} parent=1 // pred_check_branch
      %65 = sbr.rel (0) target = $region37
    $region36: #{my_model_forward.1} parent=1 // pred_region
      %66 = dma.done [#allocation11], 128
    $region37: #{my_model_forward.1} parent=1 // pred_fallthru
      _
    %67 = sfence
    %v68 = vld [vmem:[%s0] sm:$0x3f]
    %s69 = sld [smem:[#allocation3]]
    %v70 = vstv %s69
    %v71 = vmul.f32 %v68, %v70
    %v72 = vadd.f32 %v71, 0.0
    %s73 = sld [smem:[#allocation3 + $0x1b]]
    %v74 = vstv %s73
    %v75 = vmul.f32 %v68, %v74
    %v76 = vadd.f32 %v75, 0.0
    %s77 = sld [smem:[#allocation3 + $0x1]]
    %v78 = vstv %s77
    %v79 = vmul.f32 %v68, %v78
    %81 = vrot.lane.b32.xlu0 %v79, 127
    %v82 = vpop.permute.xlu0 %81
    %v83 = vrot.slane %v82, 2
    %vm84 = vcmask 1039360
    %v85 = vsel %vm84, %v82, %v83
    %v87 = vadd.f32 %v72, %v85
    %s88 = sld [smem:[#allocation3 + $0x1c]]
    %v89 = vstv %s88
    %v90 = vmul.f32 %v68, %v89
    %92 = vrot.lane.b32.xlu0 %v90, 127
    %v93 = vpop.permute.xlu0 %92
    %v94 = vrot.slane %v93, 2
    %v95 = vsel %vm84, %v93, %v94
    %v97 = vadd.f32 %v76, %v95
    %s98 = sld [smem:[#allocation3 + $0x2]]
    %v99 = vstv %s98
    %v100 = vmul.f32 %v68, %v99
    %102 = vrot.lane.b32.xlu0 %v100, 126
    %v103 = vpop.permute.xlu0 %102
    %v104 = vrot.slane %v103, 2
    %vm105 = vcmask 1031168
    %v106 = vsel %vm105, %v103, %v104
    %v108 = vadd.f32 %v87, %v106
    %s109 = sld [smem:[#allocation3 + $0x1d]]
    %v110 = vstv %s109
    %v111 = vmul.f32 %v68, %v110
    %113 = vrot.lane.b32.xlu0 %v111, 126
    %v114 = vpop.permute.xlu0 %113
    %v115 = vrot.slane %v114, 2
    %v116 = vsel %vm105, %v114, %v115
    %v118 = vadd.f32 %v97, %v116
    %s119 = sld [smem:[#allocation3 + $0x3]]
    %v120 = vstv %s119
    %v121 = vmul.f32 %v68, %v120
    %123 = vrot.lane.b32.xlu0 %v121, 112
    %v124 = vpop.permute.xlu0 %123
    %v125 = vrot.slane %v124, 2
    %vm126 = vcmask 916480
    %v127 = vsel %vm126, %v124, %v125
    %v129 = vadd.f32 %v108, %v127
    %s130 = sld [smem:[#allocation3 + $0x1e]]
    %v131 = vstv %s130
    %v132 = vmul.f32 %v68, %v131
    %134 = vrot.lane.b32.xlu0 %v132, 112
    %v135 = vpop.permute.xlu0 %134
    %v136 = vrot.slane %v135, 2
    %v137 = vsel %vm126, %v135, %v136
    %v139 = vadd.f32 %v118, %v137
    %s140 = sld [smem:[#allocation3 + $0x4]]
    %v141 = vstv %s140
    %v142 = vmul.f32 %v68, %v141
    %144 = vrot.lane.b32.xlu0 %v142, 111
    %v145 = vpop.permute.xlu0 %144
    %v146 = vrot.slane %v145, 2
    %vm147 = vcmask 908288
    %v148 = vsel %vm147, %v145, %v146
    %v150 = vadd.f32 %v129, %v148
    %s151 = sld [smem:[#allocation3 + $0x1f]]
    %v152 = vstv %s151
    %v153 = vmul.f32 %v68, %v152
    %155 = vrot.lane.b32.xlu0 %v153, 111
    %v156 = vpop.permute.xlu0 %155
    %v157 = vrot.slane %v156, 2
    %v158 = vsel %vm147, %v156, %v157
    %v160 = vadd.f32 %v139, %v158
    %s161 = sld [smem:[#allocation3 + $0x5]]
    %v162 = vstv %s161
    %v163 = vmul.f32 %v68, %v162
    %165 = vrot.lane.b32.xlu0 %v163, 110
    %v166 = vpop.permute.xlu0 %165
    %v167 = vrot.slane %v166, 2
    %vm168 = vcmask 900096
    %v169 = vsel %vm168, %v166, %v167
    %v171 = vadd.f32 %v150, %v169
    %s172 = sld [smem:[#allocation3 + $0x20]]
    %v173 = vstv %s172
    %v174 = vmul.f32 %v68, %v173
    %176 = vrot.lane.b32.xlu0 %v174, 110
    %v177 = vpop.permute.xlu0 %176
    %v178 = vrot.slane %v177, 2
    %v179 = vsel %vm168, %v177, %v178
    %v181 = vadd.f32 %v160, %v179
    %s182 = sld [smem:[#allocation3 + $0x6]]
    %v183 = vstv %s182
    %v184 = vmul.f32 %v68, %v183
    %186 = vrot.lane.b32.xlu0 %v184, 96
    %v187 = vpop.permute.xlu0 %186
    %v188 = vrot.slane %v187, 2
    %vm189 = vcmask 785408
    %v190 = vsel %vm189, %v187, %v188
    %v192 = vadd.f32 %v171, %v190
    %s193 = sld [smem:[#allocation3 + $0x21]]
    %v194 = vstv %s193
    %v195 = vmul.f32 %v68, %v194
    %197 = vrot.lane.b32.xlu0 %v195, 96
    %v198 = vpop.permute.xlu0 %197
    %v199 = vrot.slane %v198, 2
    %v200 = vsel %vm189, %v198, %v199
    %v202 = vadd.f32 %v181, %v200
    %s203 = sld [smem:[#allocation3 + $0x7]]
    %v204 = vstv %s203
    %v205 = vmul.f32 %v68, %v204
    %207 = vrot.lane.b32.xlu0 %v205, 95
    %v208 = vpop.permute.xlu0 %207
    %v209 = vrot.slane %v208, 2
    %vm210 = vcmask 777216
    %v211 = vsel %vm210, %v208, %v209
    %v213 = vadd.f32 %v192, %v211
    %s214 = sld [smem:[#allocation3 + $0x22]]
    %v215 = vstv %s214
    %v216 = vmul.f32 %v68, %v215
    %218 = vrot.lane.b32.xlu0 %v216, 95
    %v219 = vpop.permute.xlu0 %218
    %v220 = vrot.slane %v219, 2
    %v221 = vsel %vm210, %v219, %v220
    %v223 = vadd.f32 %v202, %v221
    %s224 = sld [smem:[#allocation3 + $0x8]]
    %v225 = vstv %s224
    %v226 = vmul.f32 %v68, %v225
    %228 = vrot.lane.b32.xlu0 %v226, 94
    %v229 = vpop.permute.xlu0 %228
    %v230 = vrot.slane %v229, 2
    %vm231 = vcmask 769024
    %v232 = vsel %vm231, %v229, %v230
    %v234 = vadd.f32 %v213, %v232
    %s235 = sld [smem:[#allocation3 + $0x23]]
    %v236 = vstv %s235
    %v237 = vmul.f32 %v68, %v236
    %239 = vrot.lane.b32.xlu0 %v237, 94
    %v240 = vpop.permute.xlu0 %239
    %v241 = vrot.slane %v240, 2
    %v242 = vsel %vm231, %v240, %v241
    %v244 = vadd.f32 %v223, %v242
    %s245 = scalar_lea.vmem %s0, 6
    %v246 = vld [vmem:[%s245] sm:$0x3f]
    %s247 = sld [smem:[#allocation3 + $0x9]]
    %v248 = vstv %s247
    %v249 = vmul.f32 %v246, %v248
    %v250 = vadd.f32 %v234, %v249
    %s251 = sld [smem:[#allocation3 + $0x24]]
    %v252 = vstv %s251
    %v253 = vmul.f32 %v246, %v252
    %v254 = vadd.f32 %v244, %v253
    %s255 = sld [smem:[#allocation3 + $0xa]]
    %v256 = vstv %s255
    %v257 = vmul.f32 %v246, %v256
    %259 = vrot.lane.b32.xlu0 %v257, 127
    %v260 = vpop.permute.xlu0 %259
    %v261 = vrot.slane %v260, 2
    %v262 = vsel %vm84, %v260, %v261
    %v264 = vadd.f32 %v250, %v262
    %s265 = sld [smem:[#allocation3 + $0x25]]
    %v266 = vstv %s265
    %v267 = vmul.f32 %v246, %v266
    %269 = vrot.lane.b32.xlu0 %v267, 127
    %v270 = vpop.permute.xlu0 %269
    %v271 = vrot.slane %v270, 2
    %v272 = vsel %vm84, %v270, %v271
    %v274 = vadd.f32 %v254, %v272
    %s275 = sld [smem:[#allocation3 + $0xb]]
    %v276 = vstv %s275
    %v277 = vmul.f32 %v246, %v276
    %279 = vrot.lane.b32.xlu0 %v277, 126
    %v280 = vpop.permute.xlu0 %279
    %v281 = vrot.slane %v280, 2
    %v282 = vsel %vm105, %v280, %v281
    %v284 = vadd.f32 %v264, %v282
    %s285 = sld [smem:[#allocation3 + $0x26]]
    %v286 = vstv %s285
    %v287 = vmul.f32 %v246, %v286
    %289 = vrot.lane.b32.xlu0 %v287, 126
    %v290 = vpop.permute.xlu0 %289
    %v291 = vrot.slane %v290, 2
    %v292 = vsel %vm105, %v290, %v291
    %v294 = vadd.f32 %v274, %v292
    %s295 = sld [smem:[#allocation3 + $0xc]]
    %v296 = vstv %s295
    %v297 = vmul.f32 %v246, %v296
    %299 = vrot.lane.b32.xlu0 %v297, 112
    %v300 = vpop.permute.xlu0 %299
    %v301 = vrot.slane %v300, 2
    %v302 = vsel %vm126, %v300, %v301
    %v304 = vadd.f32 %v284, %v302
    %s305 = sld [smem:[#allocation3 + $0x27]]
    %v306 = vstv %s305
    %v307 = vmul.f32 %v246, %v306
    %309 = vrot.lane.b32.xlu0 %v307, 112
    %v310 = vpop.permute.xlu0 %309
    %v311 = vrot.slane %v310, 2
    %v312 = vsel %vm126, %v310, %v311
    %v314 = vadd.f32 %v294, %v312
    %s315 = sld [smem:[#allocation3 + $0xd]]
    %v316 = vstv %s315
    %v317 = vmul.f32 %v246, %v316
    %319 = vrot.lane.b32.xlu0 %v317, 111
    %v320 = vpop.permute.xlu0 %319
    %v321 = vrot.slane %v320, 2
    %v322 = vsel %vm147, %v320, %v321
    %v324 = vadd.f32 %v304, %v322
    %s325 = sld [smem:[#allocation3 + $0x28]]
    %v326 = vstv %s325
    %v327 = vmul.f32 %v246, %v326
    %329 = vrot.lane.b32.xlu0 %v327, 111
    %v330 = vpop.permute.xlu0 %329
    %v331 = vrot.slane %v330, 2
    %v332 = vsel %vm147, %v330, %v331
    %v334 = vadd.f32 %v314, %v332
    %s335 = sld [smem:[#allocation3 + $0xe]]
    %v336 = vstv %s335
    %v337 = vmul.f32 %v246, %v336
    %339 = vrot.lane.b32.xlu0 %v337, 110
    %v340 = vpop.permute.xlu0 %339
    %v341 = vrot.slane %v340, 2
    %v342 = vsel %vm168, %v340, %v341
    %v344 = vadd.f32 %v324, %v342
    %s345 = sld [smem:[#allocation3 + $0x29]]
    %v346 = vstv %s345
    %v347 = vmul.f32 %v246, %v346
    %349 = vrot.lane.b32.xlu0 %v347, 110
    %v350 = vpop.permute.xlu0 %349
    %v351 = vrot.slane %v350, 2
    %v352 = vsel %vm168, %v350, %v351
    %v354 = vadd.f32 %v334, %v352
    %s355 = sld [smem:[#allocation3 + $0xf]]
    %v356 = vstv %s355
    %v357 = vmul.f32 %v246, %v356
    %359 = vrot.lane.b32.xlu0 %v357, 96
    %v360 = vpop.permute.xlu0 %359
    %v361 = vrot.slane %v360, 2
    %v362 = vsel %vm189, %v360, %v361
    %v364 = vadd.f32 %v344, %v362
    %s365 = sld [smem:[#allocation3 + $0x2a]]
    %v366 = vstv %s365
    %v367 = vmul.f32 %v246, %v366
    %369 = vrot.lane.b32.xlu0 %v367, 96
    %v370 = vpop.permute.xlu0 %369
    %v371 = vrot.slane %v370, 2
    %v372 = vsel %vm189, %v370, %v371
    %v374 = vadd.f32 %v354, %v372
    %s375 = sld [smem:[#allocation3 + $0x10]]
    %v376 = vstv %s375
    %v377 = vmul.f32 %v246, %v376
    %379 = vrot.lane.b32.xlu0 %v377, 95
    %v380 = vpop.permute.xlu0 %379
    %v381 = vrot.slane %v380, 2
    %v382 = vsel %vm210, %v380, %v381
    %v384 = vadd.f32 %v364, %v382
    %s385 = sld [smem:[#allocation3 + $0x2b]]
    %v386 = vstv %s385
    %v387 = vmul.f32 %v246, %v386
    %389 = vrot.lane.b32.xlu0 %v387, 95
    %v390 = vpop.permute.xlu0 %389
    %v391 = vrot.slane %v390, 2
    %v392 = vsel %vm210, %v390, %v391
    %v394 = vadd.f32 %v374, %v392
    %s395 = sld [smem:[#allocation3 + $0x11]]
    %v396 = vstv %s395
    %v397 = vmul.f32 %v246, %v396
    %399 = vrot.lane.b32.xlu0 %v397, 94
    %v400 = vpop.permute.xlu0 %399
    %v401 = vrot.slane %v400, 2
    %v402 = vsel %vm231, %v400, %v401
    %v404 = vadd.f32 %v384, %v402
    %s405 = sld [smem:[#allocation3 + $0x2c]]
    %v406 = vstv %s405
    %v407 = vmul.f32 %v246, %v406
    %409 = vrot.lane.b32.xlu0 %v407, 94
    %v410 = vpop.permute.xlu0 %409
    %v411 = vrot.slane %v410, 2
    %v412 = vsel %vm231, %v410, %v411
    %v414 = vadd.f32 %v394, %v412
    %s415 = scalar_lea.vmem %s0, 12
    %v416 = vld [vmem:[%s415] sm:$0x3f]
    %s417 = sld [smem:[#allocation3 + $0x12]]
    %v418 = vstv %s417
    %v419 = vmul.f32 %v416, %v418
    %v420 = vadd.f32 %v404, %v419
    %s421 = sld [smem:[#allocation3 + $0x2d]]
    %v422 = vstv %s421
    %v423 = vmul.f32 %v416, %v422
    %v424 = vadd.f32 %v414, %v423
    %s425 = sld [smem:[#allocation3 + $0x13]]
    %v426 = vstv %s425
    %v427 = vmul.f32 %v416, %v426
    %429 = vrot.lane.b32.xlu0 %v427, 127
    %v430 = vpop.permute.xlu0 %429
    %v431 = vrot.slane %v430, 2
    %v432 = vsel %vm84, %v430, %v431
    %v434 = vadd.f32 %v420, %v432
    %s435 = sld [smem:[#allocation3 + $0x2e]]
    %v436 = vstv %s435
    %v437 = vmul.f32 %v416, %v436
    %439 = vrot.lane.b32.xlu0 %v437, 127
    %v440 = vpop.permute.xlu0 %439
    %v441 = vrot.slane %v440, 2
    %v442 = vsel %vm84, %v440, %v441
    %v444 = vadd.f32 %v424, %v442
    %s445 = sld [smem:[#allocation3 + $0x14]]
    %v446 = vstv %s445
    %v447 = vmul.f32 %v416, %v446
    %449 = vrot.lane.b32.xlu0 %v447, 126
    %v450 = vpop.permute.xlu0 %449
    %v451 = vrot.slane %v450, 2
    %v452 = vsel %vm105, %v450, %v451
    %v454 = vadd.f32 %v434, %v452
    %s455 = sld [smem:[#allocation3 + $0x2f]]
    %v456 = vstv %s455
    %v457 = vmul.f32 %v416, %v456
    %459 = vrot.lane.b32.xlu0 %v457, 126
    %v460 = vpop.permute.xlu0 %459
    %v461 = vrot.slane %v460, 2
    %v462 = vsel %vm105, %v460, %v461
    %v464 = vadd.f32 %v444, %v462
    %s465 = sld [smem:[#allocation3 + $0x15]]
    %v466 = vstv %s465
    %v467 = vmul.f32 %v416, %v466
    %469 = vrot.lane.b32.xlu0 %v467, 112
    %v470 = vpop.permute.xlu0 %469
    %v471 = vrot.slane %v470, 2
    %v472 = vsel %vm126, %v470, %v471
    %v474 = vadd.f32 %v454, %v472
    %s475 = sld [smem:[#allocation3 + $0x30]]
    %v476 = vstv %s475
    %v477 = vmul.f32 %v416, %v476
    %479 = vrot.lane.b32.xlu0 %v477, 112
    %v480 = vpop.permute.xlu0 %479
    %v481 = vrot.slane %v480, 2
    %v482 = vsel %vm126, %v480, %v481
    %v484 = vadd.f32 %v464, %v482
    %s485 = sld [smem:[#allocation3 + $0x16]]
    %v486 = vstv %s485
    %v487 = vmul.f32 %v416, %v486
    %489 = vrot.lane.b32.xlu0 %v487, 111
    %v490 = vpop.permute.xlu0 %489
    %v491 = vrot.slane %v490, 2
    %v492 = vsel %vm147, %v490, %v491
    %v494 = vadd.f32 %v474, %v492
    %s495 = sld [smem:[#allocation3 + $0x31]]
    %v496 = vstv %s495
    %v497 = vmul.f32 %v416, %v496
    %499 = vrot.lane.b32.xlu0 %v497, 111
    %v500 = vpop.permute.xlu0 %499
    %v501 = vrot.slane %v500, 2
    %v502 = vsel %vm147, %v500, %v501
    %v504 = vadd.f32 %v484, %v502
    %s505 = sld [smem:[#allocation3 + $0x17]]
    %v506 = vstv %s505
    %v507 = vmul.f32 %v416, %v506
    %509 = vrot.lane.b32.xlu0 %v507, 110
    %v510 = vpop.permute.xlu0 %509
    %v511 = vrot.slane %v510, 2
    %v512 = vsel %vm168, %v510, %v511
    %v514 = vadd.f32 %v494, %v512
    %s515 = sld [smem:[#allocation3 + $0x32]]
    %v516 = vstv %s515
    %v517 = vmul.f32 %v416, %v516
    %519 = vrot.lane.b32.xlu0 %v517, 110
    %v520 = vpop.permute.xlu0 %519
    %v521 = vrot.slane %v520, 2
    %v522 = vsel %vm168, %v520, %v521
    %v524 = vadd.f32 %v504, %v522
    %s525 = sld [smem:[#allocation3 + $0x18]]
    %v526 = vstv %s525
    %v527 = vmul.f32 %v416, %v526
    %529 = vrot.lane.b32.xlu0 %v527, 96
    %v530 = vpop.permute.xlu0 %529
    %v531 = vrot.slane %v530, 2
    %v532 = vsel %vm189, %v530, %v531
    %v534 = vadd.f32 %v514, %v532
    %s535 = sld [smem:[#allocation3 + $0x33]]
    %v536 = vstv %s535
    %v537 = vmul.f32 %v416, %v536
    %539 = vrot.lane.b32.xlu0 %v537, 96
    %v540 = vpop.permute.xlu0 %539
    %v541 = vrot.slane %v540, 2
    %v542 = vsel %vm189, %v540, %v541
    %v544 = vadd.f32 %v524, %v542
    %s545 = sld [smem:[#allocation3 + $0x19]]
    %v546 = vstv %s545
    %v547 = vmul.f32 %v416, %v546
    %549 = vrot.lane.b32.xlu0 %v547, 95
    %v550 = vpop.permute.xlu0 %549
    %v551 = vrot.slane %v550, 2
    %v552 = vsel %vm210, %v550, %v551
    %v554 = vadd.f32 %v534, %v552
    %s555 = sld [smem:[#allocation3 + $0x34]]
    %v556 = vstv %s555
    %v557 = vmul.f32 %v416, %v556
    %559 = vrot.lane.b32.xlu0 %v557, 95
    %v560 = vpop.permute.xlu0 %559
    %v561 = vrot.slane %v560, 2
    %v562 = vsel %vm210, %v560, %v561
    %v564 = vadd.f32 %v544, %v562
    %s565 = sld [smem:[#allocation3 + $0x1a]]
    %v566 = vstv %s565
    %v567 = vmul.f32 %v416, %v566
    %569 = vrot.lane.b32.xlu0 %v567, 94
    %v570 = vpop.permute.xlu0 %569
    %v571 = vrot.slane %v570, 2
    %v572 = vsel %vm231, %v570, %v571
    %v574 = vadd.f32 %v554, %v572
    %s575 = sld [smem:[#allocation3 + $0x35]]
    %v576 = vstv %s575
    %v577 = vmul.f32 %v416, %v576
    %579 = vrot.lane.b32.xlu0 %v577, 94
    %v580 = vpop.permute.xlu0 %579
    %v581 = vrot.slane %v580, 2
    %v582 = vsel %vm231, %v580, %v581
    %v584 = vadd.f32 %v564, %v582
    %s585 = sld [smem:[#allocation7]]
    %v586 = vstv %s585
    %v587 = vadd.f32 %v574, %v586
    %v588 = vmax.f32 %v587, 0.0
    %vm589 = vcmask 1041408
    %vm590 = vcmask 781314
    %vm591 = vmor %vm590, %vm589
    %592 = vst.msk [vmem:[#allocation2] sm:$0xf] %vm591, %v588
    %s593 = sld [smem:[#allocation7 + $0x1]]
    %v594 = vstv %s593
    %v595 = vadd.f32 %v584, %v594
    %v596 = vmax.f32 %v595, 0.0
    %598 = vrot.lane.b32.xlu0 %v596, 96
    %v599 = vpop.permute.xlu0 %598
    %v600 = vrot.slane %v599, 6
    %v601 = vsel %vm189, %v600, %v599
    %vm603 = vcmask 1042176
    %vm604 = vcmask 1043458
    %vm605 = vmor %vm604, %vm603
    %vm606 = vcmask 521220
    %vm607 = vmor %vm606, %vm605
    %608 = vst.msk [vmem:[#allocation2 + $0x2] sm:$0x3f] %vm607, %v601
    %v609 = vld [vmem:[#allocation2] sm:$0xff]
    %v610 = vld [vmem:[#allocation9] sm:$0xff]
    %v611 = vld [vmem:[#allocation9 + $0x8] sm:$0xff]
    %v612 = vld [vmem:[#allocation9 + $0x10] sm:$0xff]
    %v613 = vld [vmem:[#allocation9 + $0x18] sm:$0xff]
    %v614 = vld [vmem:[#allocation9 + $0x20] sm:$0xff]
    %v615 = vld [vmem:[#allocation9 + $0x28] sm:$0xff]
    %v616 = vld [vmem:[#allocation9 + $0x30] sm:$0xff]
    %v617 = vld [vmem:[#allocation9 + $0x38] sm:$0xff]
    %v618 = vld [vmem:[#allocation9 + $0x40] sm:$0xff]
    %v619 = vld [vmem:[#allocation9 + $0x48] sm:$0xff]
    %v620 = vld [vmem:[#allocation9 + $0x50] sm:$0xff]
    %v621 = vld [vmem:[#allocation9 + $0x58] sm:$0xff]
    %v622 = vld [vmem:[#allocation9 + $0x60] sm:$0xff]
    %v623 = vld [vmem:[#allocation9 + $0x68] sm:$0xff]
    %v624 = vld [vmem:[#allocation9 + $0x70] sm:$0xff]
    %v625 = vld [vmem:[#allocation9 + $0x78] sm:$0xff]
    %v626 = vld [vmem:[#allocation9 + $0x80] sm:$0xff]
    %v627 = vld [vmem:[#allocation9 + $0x88] sm:$0xff]
    %v628 = vld [vmem:[#allocation9 + $0x90] sm:$0xff]
    %v629 = vld [vmem:[#allocation9 + $0x98] sm:$0xff]
    %v630 = vld [vmem:[#allocation9 + $0xa0] sm:$0xff]
    %v631 = vld [vmem:[#allocation9 + $0xa8] sm:$0xff]
    %v632 = vld [vmem:[#allocation9 + $0xb0] sm:$0xff]
    %v633 = vld [vmem:[#allocation9 + $0xb8] sm:$0xff]
    %v634 = vld [vmem:[#allocation9 + $0xc0] sm:$0xff]
    %v635 = vld [vmem:[#allocation9 + $0xc8] sm:$0xff]
    %v636 = vld [vmem:[#allocation9 + $0xd0] sm:$0xff]
    %v637 = vld [vmem:[#allocation9 + $0xd8] sm:$0xff]
    %v638 = vld [vmem:[#allocation9 + $0xe0] sm:$0xff]
    %v639 = vld [vmem:[#allocation9 + $0xe8] sm:$0xff]
    %v640 = vld [vmem:[#allocation9 + $0xf0] sm:$0xff]
    %v641 = vld [vmem:[#allocation9 + $0xf8] sm:$0xff]
    %v642 = vld [vmem:[#allocation9 + $0x100] sm:$0xff]
    %v643 = vld [vmem:[#allocation9 + $0x108] sm:$0xff]
    %v644 = vld [vmem:[#allocation9 + $0x110] sm:$0xff]
    %v645 = vld [vmem:[#allocation9 + $0x118] sm:$0xff]
    %v646 = vld [vmem:[#allocation9 + $0x120] sm:$0xff]
    %v647 = vld [vmem:[#allocation9 + $0x128] sm:$0xff]
    %v648 = vld [vmem:[#allocation9 + $0x130] sm:$0xff]
    %v649 = vld [vmem:[#allocation9 + $0x138] sm:$0xff]
    %v650 = vld [vmem:[#allocation9 + $0x140] sm:$0xff]
    %v651 = vld [vmem:[#allocation9 + $0x148] sm:$0xff]
    %v652 = vld [vmem:[#allocation9 + $0x150] sm:$0xff]
    %v653 = vld [vmem:[#allocation9 + $0x158] sm:$0xff]
    %v654 = vld [vmem:[#allocation9 + $0x160] sm:$0xff]
    %v655 = vld [vmem:[#allocation9 + $0x168] sm:$0xff]
    %v656 = vld [vmem:[#allocation9 + $0x170] sm:$0xff]
    %v657 = vld [vmem:[#allocation9 + $0x178] sm:$0xff]
    %v658 = vld [vmem:[#allocation9 + $0x180] sm:$0xff]
    %v659 = vld [vmem:[#allocation9 + $0x188] sm:$0xff]
    %v660 = vld [vmem:[#allocation9 + $0x190] sm:$0xff]
    %v661 = vld [vmem:[#allocation9 + $0x198] sm:$0xff]
    %v662 = vld [vmem:[#allocation9 + $0x1a0] sm:$0xff]
    %v663 = vld [vmem:[#allocation9 + $0x1a8] sm:$0xff]
    %v664 = vld [vmem:[#allocation9 + $0x1b0] sm:$0xff]
    %v665 = vld [vmem:[#allocation9 + $0x1b8] sm:$0xff]
    %v666 = vld [vmem:[#allocation9 + $0x1c0] sm:$0xff]
    %v667 = vld [vmem:[#allocation9 + $0x1c8] sm:$0xff]
    %v668 = vld [vmem:[#allocation9 + $0x1d0] sm:$0xff]
    %v669 = vld [vmem:[#allocation9 + $0x1d8] sm:$0xff]
    %v670 = vld [vmem:[#allocation9 + $0x1e0] sm:$0xff]
    %v671 = vld [vmem:[#allocation9 + $0x1e8] sm:$0xff]
    %v672 = vld [vmem:[#allocation9 + $0x1f0] sm:$0xff]
    %v673 = vld [vmem:[#allocation9 + $0x1f8] sm:$0xff]
    %v674 = vld [vmem:[#allocation9 + $0x200] sm:$0xff]
    %v675 = vld [vmem:[#allocation9 + $0x208] sm:$0xff]
    %v676 = vld [vmem:[#allocation9 + $0x210] sm:$0xff]
    %v677 = vld [vmem:[#allocation9 + $0x218] sm:$0xff]
    %v678 = vld [vmem:[#allocation9 + $0x220] sm:$0xff]
    %v679 = vld [vmem:[#allocation9 + $0x228] sm:$0xff]
    %v680 = vld [vmem:[#allocation9 + $0x230] sm:$0xff]
    %v681 = vld [vmem:[#allocation9 + $0x238] sm:$0xff]
    %v682 = vld [vmem:[#allocation9 + $0x240] sm:$0xff]
    %v683 = vld [vmem:[#allocation9 + $0x248] sm:$0xff]
    %v684 = vld [vmem:[#allocation9 + $0x250] sm:$0xff]
    %v685 = vld [vmem:[#allocation9 + $0x258] sm:$0xff]
    %v686 = vld [vmem:[#allocation9 + $0x260] sm:$0xff]
    %v687 = vld [vmem:[#allocation9 + $0x268] sm:$0xff]
    %v688 = vld [vmem:[#allocation9 + $0x270] sm:$0xff]
    %v689 = vld [vmem:[#allocation9 + $0x278] sm:$0xff]
    %v690 = vld [vmem:[#allocation9 + $0x280] sm:$0xff]
    %v691 = vld [vmem:[#allocation9 + $0x288] sm:$0xff]
    %v692 = vld [vmem:[#allocation9 + $0x290] sm:$0xff]
    %v693 = vld [vmem:[#allocation9 + $0x298] sm:$0xff]
    %v694 = vld [vmem:[#allocation9 + $0x2a0] sm:$0xff]
    %v695 = vld [vmem:[#allocation9 + $0x2a8] sm:$0xff]
    %v696 = vld [vmem:[#allocation9 + $0x2b0] sm:$0xff]
    %v697 = vld [vmem:[#allocation9 + $0x2b8] sm:$0xff]
    %v698 = vld [vmem:[#allocation9 + $0x2c0] sm:$0xff]
    %v699 = vld [vmem:[#allocation9 + $0x2c8] sm:$0xff]
    %v700 = vld [vmem:[#allocation9 + $0x2d0] sm:$0xff]
    %v701 = vld [vmem:[#allocation9 + $0x2d8] sm:$0xff]
    %v702 = vld [vmem:[#allocation9 + $0x2e0] sm:$0xff]
    %v703 = vld [vmem:[#allocation9 + $0x2e8] sm:$0xff]
    %v704 = vld [vmem:[#allocation9 + $0x2f0] sm:$0xff]
    %v705 = vld [vmem:[#allocation9 + $0x2f8] sm:$0xff]
    %v706 = vld [vmem:[#allocation9 + $0x300] sm:$0xff]
    %v707 = vld [vmem:[#allocation9 + $0x308] sm:$0xff]
    %v708 = vld [vmem:[#allocation9 + $0x310] sm:$0xff]
    %v709 = vld [vmem:[#allocation9 + $0x318] sm:$0xff]
    %v710 = vld [vmem:[#allocation9 + $0x320] sm:$0xff]
    %v711 = vld [vmem:[#allocation9 + $0x328] sm:$0xff]
    %v712 = vld [vmem:[#allocation9 + $0x330] sm:$0xff]
    %v713 = vld [vmem:[#allocation9 + $0x338] sm:$0xff]
    %v714 = vld [vmem:[#allocation9 + $0x340] sm:$0xff]
    %v715 = vld [vmem:[#allocation9 + $0x348] sm:$0xff]
    %v716 = vld [vmem:[#allocation9 + $0x350] sm:$0xff]
    %v717 = vld [vmem:[#allocation9 + $0x358] sm:$0xff]
    %v718 = vld [vmem:[#allocation9 + $0x360] sm:$0xff]
    %v719 = vld [vmem:[#allocation9 + $0x368] sm:$0xff]
    %v720 = vld [vmem:[#allocation9 + $0x370] sm:$0xff]
    %v721 = vld [vmem:[#allocation9 + $0x378] sm:$0xff]
    %v722 = vld [vmem:[#allocation9 + $0x380] sm:$0xff]
    %v723 = vld [vmem:[#allocation9 + $0x388] sm:$0xff]
    %v724 = vld [vmem:[#allocation9 + $0x390] sm:$0xff]
    %v725 = vld [vmem:[#allocation9 + $0x398] sm:$0xff]
    %v726 = vld [vmem:[#allocation9 + $0x3a0] sm:$0xff]
    %v727 = vld [vmem:[#allocation9 + $0x3a8] sm:$0xff]
    %v728 = vld [vmem:[#allocation9 + $0x3b0] sm:$0xff]
    %v729 = vld [vmem:[#allocation9 + $0x3b8] sm:$0xff]
    %v730 = vld [vmem:[#allocation9 + $0x3c0] sm:$0xff]
    %v731 = vld [vmem:[#allocation9 + $0x3c8] sm:$0xff]
    %v732 = vld [vmem:[#allocation9 + $0x3d0] sm:$0xff]
    %v733 = vld [vmem:[#allocation9 + $0x3d8] sm:$0xff]
    %v734 = vld [vmem:[#allocation9 + $0x3e0] sm:$0xff]
    %v735 = vld [vmem:[#allocation9 + $0x3e8] sm:$0xff]
    %v736 = vld [vmem:[#allocation9 + $0x3f0] sm:$0xff]
    %v737 = vld [vmem:[#allocation9 + $0x3f8] sm:$0xff]
    %v738 = vld [vmem:[#allocation9 + $0x400] sm:$0xff]
    %v739 = vld [vmem:[#allocation9 + $0x408] sm:$0xff]
    %v740 = vld [vmem:[#allocation9 + $0x410] sm:$0xff]
    %v741 = vld [vmem:[#allocation9 + $0x418] sm:$0xff]
    %v742 = vld [vmem:[#allocation9 + $0x420] sm:$0xff]
    %v743 = vld [vmem:[#allocation9 + $0x428] sm:$0xff]
    %v744 = vld [vmem:[#allocation9 + $0x430] sm:$0xff]
    %v745 = vld [vmem:[#allocation9 + $0x438] sm:$0xff]
    %v746 = vld [vmem:[#allocation9 + $0x440] sm:$0xff]
    %v747 = vld [vmem:[#allocation9 + $0x448] sm:$0xff]
    %v748 = vld [vmem:[#allocation9 + $0x450] sm:$0xff]
    %v749 = vld [vmem:[#allocation9 + $0x458] sm:$0xff]
    %v750 = vld [vmem:[#allocation9 + $0x460] sm:$0xff]
    %v751 = vld [vmem:[#allocation9 + $0x468] sm:$0xff]
    %v752 = vld [vmem:[#allocation9 + $0x470] sm:$0xff]
    %v753 = vld [vmem:[#allocation9 + $0x478] sm:$0xff]
    %v754 = vld [vmem:[#allocation9 + $0x480] sm:$0xff]
    %v755 = vld [vmem:[#allocation9 + $0x488] sm:$0xff]
    %v756 = vld [vmem:[#allocation9 + $0x490] sm:$0xff]
    %v757 = vld [vmem:[#allocation9 + $0x498] sm:$0xff]
    %v758 = vld [vmem:[#allocation9 + $0x4a0] sm:$0xff]
    %v759 = vld [vmem:[#allocation9 + $0x4a8] sm:$0xff]
    %v760 = vld [vmem:[#allocation9 + $0x4b0] sm:$0xff]
    %v761 = vld [vmem:[#allocation9 + $0x4b8] sm:$0xff]
    %v762 = vld [vmem:[#allocation9 + $0x4c0] sm:$0xff]
    %v763 = vld [vmem:[#allocation9 + $0x4c8] sm:$0xff]
    %v764 = vld [vmem:[#allocation9 + $0x4d0] sm:$0xff]
    %v765 = vld [vmem:[#allocation9 + $0x4d8] sm:$0xff]
    %v766 = vld [vmem:[#allocation9 + $0x4e0] sm:$0xff]
    %v767 = vld [vmem:[#allocation9 + $0x4e8] sm:$0xff]
    %v768 = vld [vmem:[#allocation9 + $0x4f0] sm:$0xff]
    %v769 = vld [vmem:[#allocation9 + $0x4f8] sm:$0xff]
    %v770 = vld [vmem:[#allocation9 + $0x500] sm:$0xff]
    %v771 = vld [vmem:[#allocation9 + $0x508] sm:$0xff]
    %v772 = vld [vmem:[#allocation9 + $0x510] sm:$0xff]
    %v773 = vld [vmem:[#allocation9 + $0x518] sm:$0xff]
    %v774 = vld [vmem:[#allocation9 + $0x520] sm:$0xff]
    %v775 = vld [vmem:[#allocation9 + $0x528] sm:$0xff]
    %v776 = vld [vmem:[#allocation9 + $0x530] sm:$0xff]
    %v777 = vld [vmem:[#allocation9 + $0x538] sm:$0xff]
    %v778 = vld [vmem:[#allocation9 + $0x540] sm:$0xff]
    %v779 = vld [vmem:[#allocation9 + $0x548] sm:$0xff]
    %v780 = vld [vmem:[#allocation9 + $0x550] sm:$0xff]
    %v781 = vld [vmem:[#allocation9 + $0x558] sm:$0xff]
    %v782 = vld [vmem:[#allocation9 + $0x560] sm:$0xff]
    %v783 = vld [vmem:[#allocation9 + $0x568] sm:$0xff]
    %v784 = vld [vmem:[#allocation9 + $0x570] sm:$0xff]
    %v785 = vld [vmem:[#allocation9 + $0x578] sm:$0xff]
    %v786 = vld [vmem:[#allocation9 + $0x580] sm:$0xff]
    %v787 = vld [vmem:[#allocation9 + $0x588] sm:$0xff]
    %v788 = vld [vmem:[#allocation9 + $0x590] sm:$0xff]
    %v789 = vld [vmem:[#allocation9 + $0x598] sm:$0xff]
    %v790 = vld [vmem:[#allocation9 + $0x5a0] sm:$0xff]
    %v791 = vld [vmem:[#allocation9 + $0x5a8] sm:$0xff]
    %v792 = vld [vmem:[#allocation9 + $0x5b0] sm:$0xff]
    %v793 = vld [vmem:[#allocation9 + $0x5b8] sm:$0xff]
    %v794 = vld [vmem:[#allocation9 + $0x5c0] sm:$0xff]
    %v795 = vld [vmem:[#allocation9 + $0x5c8] sm:$0xff]
    %v796 = vld [vmem:[#allocation9 + $0x5d0] sm:$0xff]
    %v797 = vld [vmem:[#allocation9 + $0x5d8] sm:$0xff]
    %v798 = vld [vmem:[#allocation9 + $0x5e0] sm:$0xff]
    %v799 = vld [vmem:[#allocation9 + $0x5e8] sm:$0xff]
    %v800 = vld [vmem:[#allocation9 + $0x5f0] sm:$0xff]
    %v801 = vld [vmem:[#allocation9 + $0x5f8] sm:$0xff]
    %v802 = vld [vmem:[#allocation9 + $0x600] sm:$0xff]
    %v803 = vld [vmem:[#allocation9 + $0x608] sm:$0xff]
    %v804 = vld [vmem:[#allocation9 + $0x610] sm:$0xff]
    %v805 = vld [vmem:[#allocation9 + $0x618] sm:$0xff]
    %v806 = vld [vmem:[#allocation9 + $0x620] sm:$0xff]
    %v807 = vld [vmem:[#allocation9 + $0x628] sm:$0xff]
    %v808 = vld [vmem:[#allocation9 + $0x630] sm:$0xff]
    %v809 = vld [vmem:[#allocation9 + $0x638] sm:$0xff]
    %v810 = vld [vmem:[#allocation9 + $0x640] sm:$0xff]
    %v811 = vld [vmem:[#allocation9 + $0x648] sm:$0xff]
    %v812 = vld [vmem:[#allocation9 + $0x650] sm:$0xff]
    %v813 = vld [vmem:[#allocation9 + $0x658] sm:$0xff]
    %v814 = vld [vmem:[#allocation9 + $0x660] sm:$0xff]
    %v815 = vld [vmem:[#allocation9 + $0x668] sm:$0xff]
    %v816 = vld [vmem:[#allocation9 + $0x670] sm:$0xff]
    %v817 = vld [vmem:[#allocation9 + $0x678] sm:$0xff]
    %v818 = vld [vmem:[#allocation9 + $0x680] sm:$0xff]
    %v819 = vld [vmem:[#allocation9 + $0x688] sm:$0xff]
    %v820 = vld [vmem:[#allocation9 + $0x690] sm:$0xff]
    %v821 = vld [vmem:[#allocation9 + $0x698] sm:$0xff]
    %v822 = vld [vmem:[#allocation9 + $0x6a0] sm:$0xff]
    %v823 = vld [vmem:[#allocation9 + $0x6a8] sm:$0xff]
    %v824 = vld [vmem:[#allocation9 + $0x6b0] sm:$0xff]
    %v825 = vld [vmem:[#allocation9 + $0x6b8] sm:$0xff]
    %v826 = vld [vmem:[#allocation9 + $0x6c0] sm:$0xff]
    %v827 = vld [vmem:[#allocation9 + $0x6c8] sm:$0xff]
    %v828 = vld [vmem:[#allocation9 + $0x6d0] sm:$0xff]
    %v829 = vld [vmem:[#allocation9 + $0x6d8] sm:$0xff]
    %v830 = vld [vmem:[#allocation9 + $0x6e0] sm:$0xff]
    %v831 = vld [vmem:[#allocation9 + $0x6e8] sm:$0xff]
    %v832 = vld [vmem:[#allocation9 + $0x6f0] sm:$0xff]
    %v833 = vld [vmem:[#allocation9 + $0x6f8] sm:$0xff]
    %v834 = vld [vmem:[#allocation9 + $0x700] sm:$0xff]
    %v835 = vld [vmem:[#allocation9 + $0x708] sm:$0xff]
    %v836 = vld [vmem:[#allocation9 + $0x710] sm:$0xff]
    %v837 = vld [vmem:[#allocation9 + $0x718] sm:$0xff]
    %v838 = vld [vmem:[#allocation9 + $0x720] sm:$0xff]
    %v839 = vld [vmem:[#allocation9 + $0x728] sm:$0xff]
    %v840 = vld [vmem:[#allocation9 + $0x730] sm:$0xff]
    %v841 = vld [vmem:[#allocation9 + $0x738] sm:$0xff]
    %v842 = vld [vmem:[#allocation9 + $0x740] sm:$0xff]
    %v843 = vld [vmem:[#allocation9 + $0x748] sm:$0xff]
    %v844 = vld [vmem:[#allocation9 + $0x750] sm:$0xff]
    %v845 = vld [vmem:[#allocation9 + $0x758] sm:$0xff]
    %v846 = vld [vmem:[#allocation9 + $0x760] sm:$0xff]
    %v847 = vld [vmem:[#allocation9 + $0x768] sm:$0xff]
    %v848 = vld [vmem:[#allocation9 + $0x770] sm:$0xff]
    %v849 = vld [vmem:[#allocation9 + $0x778] sm:$0xff]
    %v850 = vld [vmem:[#allocation9 + $0x780] sm:$0xff]
    %v851 = vld [vmem:[#allocation9 + $0x788] sm:$0xff]
    %v852 = vld [vmem:[#allocation9 + $0x790] sm:$0xff]
    %v853 = vld [vmem:[#allocation9 + $0x798] sm:$0xff]
    %v854 = vld [vmem:[#allocation9 + $0x7a0] sm:$0xff]
    %v855 = vld [vmem:[#allocation9 + $0x7a8] sm:$0xff]
    %v856 = vld [vmem:[#allocation9 + $0x7b0] sm:$0xff]
    %v857 = vld [vmem:[#allocation9 + $0x7b8] sm:$0xff]
    %v858 = vld [vmem:[#allocation9 + $0x7c0] sm:$0xff]
    %v859 = vld [vmem:[#allocation9 + $0x7c8] sm:$0xff]
    %v860 = vld [vmem:[#allocation9 + $0x7d0] sm:$0xff]
    %v861 = vld [vmem:[#allocation9 + $0x7d8] sm:$0xff]
    %v862 = vld [vmem:[#allocation9 + $0x7e0] sm:$0xff]
    %v863 = vld [vmem:[#allocation9 + $0x7e8] sm:$0xff]
    %v864 = vld [vmem:[#allocation9 + $0x7f0] sm:$0xff]
    %v865 = vld [vmem:[#allocation9 + $0x7f8] sm:$0xff]
    %v866 = vld [vmem:[#allocation9 + $0x800] sm:$0xff]
    %v867 = vld [vmem:[#allocation9 + $0x808] sm:$0xff]
    %v868 = vld [vmem:[#allocation9 + $0x810] sm:$0xff]
    %v869 = vld [vmem:[#allocation9 + $0x818] sm:$0xff]
    %v870 = vld [vmem:[#allocation9 + $0x820] sm:$0xff]
    %v871 = vld [vmem:[#allocation9 + $0x828] sm:$0xff]
    %v872 = vld [vmem:[#allocation9 + $0x830] sm:$0xff]
    %v873 = vld [vmem:[#allocation9 + $0x838] sm:$0xff]
    %v874 = vld [vmem:[#allocation9 + $0x840] sm:$0xff]
    %v875 = vld [vmem:[#allocation9 + $0x848] sm:$0xff]
    %v876 = vld [vmem:[#allocation9 + $0x850] sm:$0xff]
    %v877 = vld [vmem:[#allocation9 + $0x858] sm:$0xff]
    %v878 = vld [vmem:[#allocation9 + $0x860] sm:$0xff]
    %v879 = vld [vmem:[#allocation9 + $0x868] sm:$0xff]
    %v880 = vld [vmem:[#allocation9 + $0x870] sm:$0xff]
    %v881 = vld [vmem:[#allocation9 + $0x878] sm:$0xff]
    %v882 = vld [vmem:[#allocation9 + $0x880] sm:$0xff]
    %v883 = vld [vmem:[#allocation9 + $0x888] sm:$0xff]
    %v884 = vld [vmem:[#allocation9 + $0x890] sm:$0xff]
    %v885 = vld [vmem:[#allocation9 + $0x898] sm:$0xff]
    %v886 = vld [vmem:[#allocation9 + $0x8a0] sm:$0xff]
    %v887 = vld [vmem:[#allocation9 + $0x8a8] sm:$0xff]
    %v888 = vld [vmem:[#allocation9 + $0x8b0] sm:$0xff]
    %v889 = vld [vmem:[#allocation9 + $0x8b8] sm:$0xff]
    %v890 = vld [vmem:[#allocation9 + $0x8c0] sm:$0xff]
    %v891 = vld [vmem:[#allocation9 + $0x8c8] sm:$0xff]
    %v892 = vld [vmem:[#allocation9 + $0x8d0] sm:$0xff]
    %v893 = vld [vmem:[#allocation9 + $0x8d8] sm:$0xff]
    %v894 = vld [vmem:[#allocation9 + $0x8e0] sm:$0xff]
    %v895 = vld [vmem:[#allocation9 + $0x8e8] sm:$0xff]
    %v896 = vld [vmem:[#allocation9 + $0x8f0] sm:$0xff]
    %v897 = vld [vmem:[#allocation9 + $0x8f8] sm:$0xff]
    %v898 = vld [vmem:[#allocation9 + $0x900] sm:$0xff]
    %v899 = vld [vmem:[#allocation9 + $0x908] sm:$0xff]
    %v900 = vld [vmem:[#allocation9 + $0x910] sm:$0xff]
    %v901 = vld [vmem:[#allocation9 + $0x918] sm:$0xff]
    %v902 = vld [vmem:[#allocation9 + $0x920] sm:$0xff]
    %v903 = vld [vmem:[#allocation9 + $0x928] sm:$0xff]
    %v904 = vld [vmem:[#allocation9 + $0x930] sm:$0xff]
    %v905 = vld [vmem:[#allocation9 + $0x938] sm:$0xff]
    %v906 = vld [vmem:[#allocation9 + $0x940] sm:$0xff]
    %v907 = vld [vmem:[#allocation9 + $0x948] sm:$0xff]
    %v908 = vld [vmem:[#allocation9 + $0x950] sm:$0xff]
    %v909 = vld [vmem:[#allocation9 + $0x958] sm:$0xff]
    %v910 = vld [vmem:[#allocation9 + $0x960] sm:$0xff]
    %v911 = vld [vmem:[#allocation9 + $0x968] sm:$0xff]
    %v912 = vld [vmem:[#allocation9 + $0x970] sm:$0xff]
    %v913 = vld [vmem:[#allocation9 + $0x978] sm:$0xff]
    %v914 = vld [vmem:[#allocation9 + $0x980] sm:$0xff]
    %v915 = vld [vmem:[#allocation9 + $0x988] sm:$0xff]
    %v916 = vld [vmem:[#allocation9 + $0x990] sm:$0xff]
    %v917 = vld [vmem:[#allocation9 + $0x998] sm:$0xff]
    %v918 = vld [vmem:[#allocation9 + $0x9a0] sm:$0xff]
    %v919 = vld [vmem:[#allocation9 + $0x9a8] sm:$0xff]
    %v920 = vld [vmem:[#allocation9 + $0x9b0] sm:$0xff]
    %v921 = vld [vmem:[#allocation9 + $0x9b8] sm:$0xff]
    %v922 = vld [vmem:[#allocation9 + $0x9c0] sm:$0xff]
    %v923 = vld [vmem:[#allocation9 + $0x9c8] sm:$0xff]
    %v924 = vld [vmem:[#allocation9 + $0x9d0] sm:$0xff]
    %v925 = vld [vmem:[#allocation9 + $0x9d8] sm:$0xff]
    %v926 = vld [vmem:[#allocation9 + $0x9e0] sm:$0xff]
    %v927 = vld [vmem:[#allocation9 + $0x9e8] sm:$0xff]
    %v928 = vld [vmem:[#allocation9 + $0x9f0] sm:$0xff]
    %v929 = vld [vmem:[#allocation9 + $0x9f8] sm:$0xff]
    %v930 = vld [vmem:[#allocation9 + $0xa00] sm:$0xff]
    %v931 = vld [vmem:[#allocation9 + $0xa08] sm:$0xff]
    %v932 = vld [vmem:[#allocation9 + $0xa10] sm:$0xff]
    %v933 = vld [vmem:[#allocation9 + $0xa18] sm:$0xff]
    %v934 = vld [vmem:[#allocation9 + $0xa20] sm:$0xff]
    %v935 = vld [vmem:[#allocation9 + $0xa28] sm:$0xff]
    %v936 = vld [vmem:[#allocation9 + $0xa30] sm:$0xff]
    %v937 = vld [vmem:[#allocation9 + $0xa38] sm:$0xff]
    %v938 = vld [vmem:[#allocation9 + $0xa40] sm:$0xff]
    %v939 = vld [vmem:[#allocation9 + $0xa48] sm:$0xff]
    %v940 = vld [vmem:[#allocation9 + $0xa50] sm:$0xff]
    %v941 = vld [vmem:[#allocation9 + $0xa58] sm:$0xff]
    %v942 = vld [vmem:[#allocation9 + $0xa60] sm:$0xff]
    %v943 = vld [vmem:[#allocation9 + $0xa68] sm:$0xff]
    %v944 = vld [vmem:[#allocation9 + $0xa70] sm:$0xff]
    %v945 = vld [vmem:[#allocation9 + $0xa78] sm:$0xff]
    %v946 = vld [vmem:[#allocation9 + $0xa80] sm:$0xff]
    %v947 = vld [vmem:[#allocation9 + $0xa88] sm:$0xff]
    %v948 = vld [vmem:[#allocation9 + $0xa90] sm:$0xff]
    %v949 = vld [vmem:[#allocation9 + $0xa98] sm:$0xff]
    %v950 = vld [vmem:[#allocation9 + $0xaa0] sm:$0xff]
    %v951 = vld [vmem:[#allocation9 + $0xaa8] sm:$0xff]
    %v952 = vld [vmem:[#allocation9 + $0xab0] sm:$0xff]
    %v953 = vld [vmem:[#allocation9 + $0xab8] sm:$0xff]
    %v954 = vld [vmem:[#allocation9 + $0xac0] sm:$0xff]
    %v955 = vld [vmem:[#allocation9 + $0xac8] sm:$0xff]
    %v956 = vld [vmem:[#allocation9 + $0xad0] sm:$0xff]
    %v957 = vld [vmem:[#allocation9 + $0xad8] sm:$0xff]
    %v958 = vld [vmem:[#allocation9 + $0xae0] sm:$0xff]
    %v959 = vld [vmem:[#allocation9 + $0xae8] sm:$0xff]
    %v960 = vld [vmem:[#allocation9 + $0xaf0] sm:$0xff]
    %v961 = vld [vmem:[#allocation9 + $0xaf8] sm:$0xff]
    %v962 = vld [vmem:[#allocation9 + $0xb00] sm:$0xff]
    %v963 = vld [vmem:[#allocation9 + $0xb08] sm:$0xff]
    %v964 = vld [vmem:[#allocation9 + $0xb10] sm:$0xff]
    %v965 = vld [vmem:[#allocation9 + $0xb18] sm:$0xff]
    %v966 = vld [vmem:[#allocation9 + $0xb20] sm:$0xff]
    %v967 = vld [vmem:[#allocation9 + $0xb28] sm:$0xff]
    %v968 = vld [vmem:[#allocation9 + $0xb30] sm:$0xff]
    %v969 = vld [vmem:[#allocation9 + $0xb38] sm:$0xff]
    %v970 = vld [vmem:[#allocation9 + $0xb40] sm:$0xff]
    %v971 = vld [vmem:[#allocation9 + $0xb48] sm:$0xff]
    %v972 = vld [vmem:[#allocation9 + $0xb50] sm:$0xff]
    %v973 = vld [vmem:[#allocation9 + $0xb58] sm:$0xff]
    %v974 = vld [vmem:[#allocation9 + $0xb60] sm:$0xff]
    %v975 = vld [vmem:[#allocation9 + $0xb68] sm:$0xff]
    %v976 = vld [vmem:[#allocation9 + $0xb70] sm:$0xff]
    %v977 = vld [vmem:[#allocation9 + $0xb78] sm:$0xff]
    %v978 = vld [vmem:[#allocation9 + $0xb80] sm:$0xff]
    %v979 = vld [vmem:[#allocation9 + $0xb88] sm:$0xff]
    %v980 = vld [vmem:[#allocation9 + $0xb90] sm:$0xff]
    %v981 = vld [vmem:[#allocation9 + $0xb98] sm:$0xff]
    %v982 = vld [vmem:[#allocation9 + $0xba0] sm:$0xff]
    %v983 = vld [vmem:[#allocation9 + $0xba8] sm:$0xff]
    %v984 = vld [vmem:[#allocation9 + $0xbb0] sm:$0xff]
    %v985 = vld [vmem:[#allocation9 + $0xbb8] sm:$0xff]
    %v986 = vld [vmem:[#allocation9 + $0xbc0] sm:$0xff]
    %v987 = vld [vmem:[#allocation9 + $0xbc8] sm:$0xff]
    %v988 = vld [vmem:[#allocation9 + $0xbd0] sm:$0xff]
    %v989 = vld [vmem:[#allocation9 + $0xbd8] sm:$0xff]
    %v990 = vld [vmem:[#allocation9 + $0xbe0] sm:$0xff]
    %v991 = vld [vmem:[#allocation9 + $0xbe8] sm:$0xff]
    %v992 = vld [vmem:[#allocation9 + $0xbf0] sm:$0xff]
    %v993 = vld [vmem:[#allocation9 + $0xbf8] sm:$0xff]
    %v994 = vld [vmem:[#allocation9 + $0xc00] sm:$0xff]
    %v995 = vld [vmem:[#allocation9 + $0xc08] sm:$0xff]
    %v996 = vld [vmem:[#allocation9 + $0xc10] sm:$0xff]
    %v997 = vld [vmem:[#allocation9 + $0xc18] sm:$0xff]
    %v998 = vld [vmem:[#allocation9 + $0xc20] sm:$0xff]
    %v999 = vld [vmem:[#allocation9 + $0xc28] sm:$0xff]
    %v1000 = vld [vmem:[#allocation9 + $0xc30] sm:$0xff]
    %v1001 = vld [vmem:[#allocation9 + $0xc38] sm:$0xff]
    %v1002 = vld [vmem:[#allocation9 + $0xc40] sm:$0xff]
    %v1003 = vld [vmem:[#allocation9 + $0xc48] sm:$0xff]
    %v1004 = vld [vmem:[#allocation9 + $0xc50] sm:$0xff]
    %v1005 = vld [vmem:[#allocation9 + $0xc58] sm:$0xff]
    %v1006 = vld [vmem:[#allocation9 + $0xc60] sm:$0xff]
    %v1007 = vld [vmem:[#allocation9 + $0xc68] sm:$0xff]
    %v1008 = vld [vmem:[#allocation9 + $0xc70] sm:$0xff]
    %v1009 = vld [vmem:[#allocation9 + $0xc78] sm:$0xff]
    %v1010 = vld [vmem:[#allocation9 + $0xc80] sm:$0xff]
    %v1011 = vld [vmem:[#allocation9 + $0xc88] sm:$0xff]
    %v1012 = vld [vmem:[#allocation9 + $0xc90] sm:$0xff]
    %v1013 = vld [vmem:[#allocation9 + $0xc98] sm:$0xff]
    %v1014 = vld [vmem:[#allocation9 + $0xca0] sm:$0xff]
    %v1015 = vld [vmem:[#allocation9 + $0xca8] sm:$0xff]
    %v1016 = vld [vmem:[#allocation9 + $0xcb0] sm:$0xff]
    %v1017 = vld [vmem:[#allocation9 + $0xcb8] sm:$0xff]
    %v1018 = vld [vmem:[#allocation9 + $0xcc0] sm:$0xff]
    %v1019 = vld [vmem:[#allocation9 + $0xcc8] sm:$0xff]
    %v1020 = vld [vmem:[#allocation9 + $0xcd0] sm:$0xff]
    %v1021 = vld [vmem:[#allocation9 + $0xcd8] sm:$0xff]
    %v1022 = vld [vmem:[#allocation9 + $0xce0] sm:$0xff]
    %v1023 = vld [vmem:[#allocation9 + $0xce8] sm:$0xff]
    %v1024 = vld [vmem:[#allocation9 + $0xcf0] sm:$0xff]
    %v1025 = vld [vmem:[#allocation9 + $0xcf8] sm:$0xff]
    %v1026 = vld [vmem:[#allocation9 + $0xd00] sm:$0xff]
    %v1027 = vld [vmem:[#allocation9 + $0xd08] sm:$0xff]
    %v1028 = vld [vmem:[#allocation9 + $0xd10] sm:$0xff]
    %v1029 = vld [vmem:[#allocation9 + $0xd18] sm:$0xff]
    %v1030 = vld [vmem:[#allocation9 + $0xd20] sm:$0xff]
    %v1031 = vld [vmem:[#allocation9 + $0xd28] sm:$0xff]
    %v1032 = vld [vmem:[#allocation9 + $0xd30] sm:$0xff]
    %v1033 = vld [vmem:[#allocation9 + $0xd38] sm:$0xff]
    %v1034 = vld [vmem:[#allocation9 + $0xd40] sm:$0xff]
    %v1035 = vld [vmem:[#allocation9 + $0xd48] sm:$0xff]
    %v1036 = vld [vmem:[#allocation9 + $0xd50] sm:$0xff]
    %v1037 = vld [vmem:[#allocation9 + $0xd58] sm:$0xff]
    %v1038 = vld [vmem:[#allocation9 + $0xd60] sm:$0xff]
    %v1039 = vld [vmem:[#allocation9 + $0xd68] sm:$0xff]
    %v1040 = vld [vmem:[#allocation9 + $0xd70] sm:$0xff]
    %v1041 = vld [vmem:[#allocation9 + $0xd78] sm:$0xff]
    %v1042 = vld [vmem:[#allocation9 + $0xd80] sm:$0xff]
    %v1043 = vld [vmem:[#allocation9 + $0xd88] sm:$0xff]
    %v1044 = vld [vmem:[#allocation9 + $0xd90] sm:$0xff]
    %v1045 = vld [vmem:[#allocation9 + $0xd98] sm:$0xff]
    %v1046 = vld [vmem:[#allocation9 + $0xda0] sm:$0xff]
    %v1047 = vld [vmem:[#allocation9 + $0xda8] sm:$0xff]
    %v1048 = vld [vmem:[#allocation9 + $0xdb0] sm:$0xff]
    %v1049 = vld [vmem:[#allocation9 + $0xdb8] sm:$0xff]
    %v1050 = vld [vmem:[#allocation9 + $0xdc0] sm:$0xff]
    %v1051 = vld [vmem:[#allocation9 + $0xdc8] sm:$0xff]
    %v1052 = vld [vmem:[#allocation9 + $0xdd0] sm:$0xff]
    %v1053 = vld [vmem:[#allocation9 + $0xdd8] sm:$0xff]
    %v1054 = vld [vmem:[#allocation9 + $0xde0] sm:$0xff]
    %v1055 = vld [vmem:[#allocation9 + $0xde8] sm:$0xff]
    %v1056 = vld [vmem:[#allocation9 + $0xdf0] sm:$0xff]
    %v1057 = vld [vmem:[#allocation9 + $0xdf8] sm:$0xff]
    %v1058 = vld [vmem:[#allocation10] sm:$0xff]
    %v1060 = vlaneseq
    %v1061 = vshrl.u32 %v1060, 7
    %v1062 = vsub.s32 0, %v1061
    %v1063 = vrot.slane %v1058, %v1062
    %v1064 = vlaneseq
    %v1065 = vshrl.u32 %v1064, 7
    %v1066 = vsub.s32 1, %v1065
    %v1067 = vrot.slane %v1058, %v1066
    %v1068 = vlaneseq
    %v1069 = vshrl.u32 %v1068, 7
    %v1070 = vsub.s32 2, %v1069
    %v1071 = vrot.slane %v1058, %v1070
    %v1072 = vlaneseq
    %v1073 = vshrl.u32 %v1072, 7
    %v1074 = vsub.s32 3, %v1073
    %v1075 = vrot.slane %v1058, %v1074
    %v1076 = vlaneseq
    %v1077 = vshrl.u32 %v1076, 7
    %v1078 = vsub.s32 4, %v1077
    %v1079 = vrot.slane %v1058, %v1078
    %v1080 = vlaneseq
    %v1081 = vshrl.u32 %v1080, 7
    %v1082 = vsub.s32 5, %v1081
    %v1083 = vrot.slane %v1058, %v1082
    %v1084 = vlaneseq
    %v1085 = vshrl.u32 %v1084, 7
    %v1086 = vsub.s32 6, %v1085
    %v1087 = vrot.slane %v1058, %v1086
    %v1088 = vlaneseq
    %v1089 = vshrl.u32 %v1088, 7
    %v1090 = vsub.s32 7, %v1089
    %v1091 = vrot.slane %v1058, %v1090
    %v1101 = vcombine.high %v609, %v609
    %v1103 = vunpack.c.l.s4 1983009808
    %v1104 = vunpack.c.0.s8 %v1103
    %v1105 = vlaneseq
    %v1106 = vshrl.u32 %v1105, 7
    %v1107 = vsub.s32 %v1104, %v1106
    %v1108 = vrot.slane %v609, %v1107
    %v1110 = vunpack.c.l.s4 1983009808
    %v1111 = vunpack.c.0.s8 %v1110
    %v1112 = vlaneseq
    %v1113 = vshrl.u32 %v1112, 7
    %v1114 = vsub.s32 %v1111, %v1113
    %v1115 = vrot.slane %v1101, %v1114
    %v1116 = vcombine.high %v1108, %v1108
    %v1117 = vcombine.high %v1115, %v1115
    %vm1121 = vcmask 523264
    %v1122 = vsel %vm1121, %v1117, 0
    %1124 = vmatprep.subr.mxu0 %v611
    %1125 = vmatpush1.msra.mxu0 %v610
    %1126 = vmatprep.subr.mxu0 %v619
    %1127 = vmatpush1.msra.mxu0 %v618
    %1128 = vmatprep.subr.mxu0 %v627
    %1129 = vmatpush1.msra.mxu0 %v626
    %1130 = vmatprep.subr.mxu0 %v635
    %1131 = vmatpush1.msra.mxu0 %v634
    %1132 = vmatprep.subr.mxu0 %v643
    %1133 = vmatpush1.msra.mxu0 %v642
    %1134 = vmatprep.subr.mxu0 %v651
    %1135 = vmatpush1.msra.mxu0 %v650
    %1136 = vmatprep.subr.mxu0 %v659
    %1137 = vmatpush1.msra.mxu0 %v658
    %1138 = vmatprep.subr.mxu0 %v667
    %1139 = vmatpush1.msra.mxu0 %v666
    %1140 = vmatprep.subr.mxu0 %v675
    %1141 = vmatpush1.msra.mxu0 %v674
    %1142 = vmatprep.subr.mxu0 %v683
    %1143 = vmatpush1.msra.mxu0 %v682
    %1144 = vmatprep.subr.mxu0 %v691
    %1145 = vmatpush1.msra.mxu0 %v690
    %1146 = vmatprep.subr.mxu0 %v699
    %1147 = vmatpush1.msra.mxu0 %v698
    %1148 = vmatprep.subr.mxu0 %v707
    %1149 = vmatpush1.msra.mxu0 %v706
    %1150 = vmatprep.subr.mxu0 %v715
    %1151 = vmatpush1.msra.mxu0 %v714
    %1152 = vmatprep.subr.mxu0 %v723
    %1153 = vmatpush1.msra.mxu0 %v722
    %1154 = vmatprep.subr.mxu0 %v731
    %1155 = vmatpush1.msra.mxu0 %v730
    %1156 = vmatprep.subr.mxu0 %v739
    %1157 = vmatpush1.msra.mxu0 %v738
    %1158 = vmatprep.subr.mxu0 %v747
    %1159 = vmatpush1.msra.mxu0 %v746
    %1160 = vmatprep.subr.mxu0 %v755
    %1161 = vmatpush1.msra.mxu0 %v754
    %1162 = vmatprep.subr.mxu0 %v763
    %1163 = vmatpush1.msra.mxu0 %v762
    %1164 = vmatprep.subr.mxu0 %v771
    %1165 = vmatpush1.msra.mxu0 %v770
    %1166 = vmatprep.subr.mxu0 %v779
    %1167 = vmatpush1.msra.mxu0 %v778
    %1168 = vmatprep.subr.mxu0 %v787
    %1169 = vmatpush1.msra.mxu0 %v786
    %1170 = vmatprep.subr.mxu0 %v795
    %1171 = vmatpush1.msra.mxu0 %v794
    %1172 = vmatprep.subr.mxu0 %v803
    %1173 = vmatpush1.msra.mxu0 %v802
    %1174 = vmatprep.subr.mxu0 %v811
    %1175 = vmatpush1.msra.mxu0 %v810
    %1176 = vmatprep.subr.mxu0 %v819
    %1177 = vmatpush1.msra.mxu0 %v818
    %1178 = vmatprep.subr.mxu0 %v827
    %1179 = vmatpush1.msra.mxu0 %v826
    %1180 = vmatprep.subr.mxu0 %v835
    %1181 = vmatpush1.msra.mxu0 %v834
    %1182 = vmatprep.subr.mxu0 %v843
    %1183 = vmatpush1.msra.mxu0 %v842
    %1184 = vmatprep.subr.mxu0 %v851
    %1185 = vmatpush1.msra.mxu0 %v850
    %1186 = vmatprep.subr.mxu0 %v859
    %1187 = vmatpush1.msra.mxu0 %v858
    %1188 = vmatprep.mubr.f32.mxu0 %v1116
    %1189 = vmatmul.mubr.f32.gmra.mrb[0].mxu0 %v1108
    %v1190 = vpop.f32.mrb[0].mxu0
    %v1191 = vadd.f32 %v1063, %v1190
    %v1192 = vpop.f32.mrb[0].mxu0
    %v1193 = vadd.f32 %v1067, %v1192
    %1194 = vdwg.mxu0
    %1195 = vmatprep.subr.mxu0 %v867
    %1196 = vmatpush1.msra.mxu0 %v866
    %1197 = vmatprep.subr.mxu0 %v875
    %1198 = vmatpush1.msra.mxu0 %v874
    %1199 = vmatprep.subr.mxu0 %v883
    %1200 = vmatpush1.msra.mxu0 %v882
    %1201 = vmatprep.subr.mxu0 %v891
    %1202 = vmatpush1.msra.mxu0 %v890
    %1203 = vmatprep.subr.mxu0 %v899
    %1204 = vmatpush1.msra.mxu0 %v898
    %1205 = vmatprep.subr.mxu0 %v907
    %1206 = vmatpush1.msra.mxu0 %v906
    %1207 = vmatprep.subr.mxu0 %v915
    %1208 = vmatpush1.msra.mxu0 %v914
    %1209 = vmatprep.subr.mxu0 %v923
    %1210 = vmatpush1.msra.mxu0 %v922
    %1211 = vmatprep.subr.mxu0 %v931
    %1212 = vmatpush1.msra.mxu0 %v930
    %1213 = vmatprep.subr.mxu0 %v939
    %1214 = vmatpush1.msra.mxu0 %v938
    %1215 = vmatprep.subr.mxu0 %v947
    %1216 = vmatpush1.msra.mxu0 %v946
    %1217 = vmatprep.subr.mxu0 %v955
    %1218 = vmatpush1.msra.mxu0 %v954
    %1219 = vmatprep.subr.mxu0 %v963
    %1220 = vmatpush1.msra.mxu0 %v962
    %1221 = vmatprep.subr.mxu0 %v971
    %1222 = vmatpush1.msra.mxu0 %v970
    %1223 = vmatprep.subr.mxu0 %v979
    %1224 = vmatpush1.msra.mxu0 %v978
    %1225 = vmatprep.subr.mxu0 %v987
    %1226 = vmatpush1.msra.mxu0 %v986
    %1227 = vmatprep.subr.mxu0 %v995
    %1228 = vmatpush1.msra.mxu0 %v994
    %1229 = vmatprep.subr.mxu0 %v1003
    %1230 = vmatpush1.msra.mxu0 %v1002
    %1231 = vmatprep.subr.mxu0 %v1011
    %1232 = vmatpush1.msra.mxu0 %v1010
    %1233 = vmatprep.subr.mxu0 %v1019
    %1234 = vmatpush1.msra.mxu0 %v1018
    %1235 = vmatprep.subr.mxu0 %v1027
    %1236 = vmatpush1.msra.mxu0 %v1026
    %1237 = vmatprep.subr.mxu0 %v1035
    %1238 = vmatpush1.msra.mxu0 %v1034
    %1239 = vmatprep.subr.mxu0 %v1043
    %1240 = vmatpush1.msra.mxu0 %v1042
    %1241 = vmatprep.subr.mxu0 %v1051
    %1242 = vmatpush1.msra.mxu0 %v1050
    %1243 = vmatprep.subr.mxu0 0.0
    %1244 = vmatpush1.msra.mxu0 0.0
    %1245 = vmatprep.subr.mxu0 0.0
    %1246 = vmatpush1.msra.mxu0 0.0
    %1247 = vmatprep.subr.mxu0 0.0
    %1248 = vmatpush1.msra.mxu0 0.0
    %1249 = vmatprep.subr.mxu0 0.0
    %1250 = vmatpush1.msra.mxu0 0.0
    %1251 = vmatprep.subr.mxu0 0.0
    %1252 = vmatpush1.msra.mxu0 0.0
    %1253 = vmatprep.subr.mxu0 0.0
    %1254 = vmatpush1.msra.mxu0 0.0
    %1255 = vmatprep.subr.mxu0 0.0
    %1256 = vmatpush1.msra.mxu0 0.0
    %1257 = vmatprep.subr.mxu0 0.0
    %1258 = vmatpush1.msra.mxu0 0.0
    %1259 = vmatprep.mubr.f32.mxu0 %v1122
    %1260 = vmatmul.mubr.f32.gmra.mrb[0].mxu0 %v1115
    %v1261 = vpop.f32.mrb[0].mxu0
    %v1262 = vadd.f32 %v1191, %v1261
    %v1263 = vpop.f32.mrb[0].mxu0
    %v1264 = vadd.f32 %v1193, %v1263
    %1265 = vdwg.mxu0
    %1266 = vmatprep.subr.mxu0 %v613
    %1267 = vmatpush1.msra.mxu0 %v612
    %1268 = vmatprep.subr.mxu0 %v621
    %1269 = vmatpush1.msra.mxu0 %v620
    %1270 = vmatprep.subr.mxu0 %v629
    %1271 = vmatpush1.msra.mxu0 %v628
    %1272 = vmatprep.subr.mxu0 %v637
    %1273 = vmatpush1.msra.mxu0 %v636
    %1274 = vmatprep.subr.mxu0 %v645
    %1275 = vmatpush1.msra.mxu0 %v644
    %1276 = vmatprep.subr.mxu0 %v653
    %1277 = vmatpush1.msra.mxu0 %v652
    %1278 = vmatprep.subr.mxu0 %v661
    %1279 = vmatpush1.msra.mxu0 %v660
    %1280 = vmatprep.subr.mxu0 %v669
    %1281 = vmatpush1.msra.mxu0 %v668
    %1282 = vmatprep.subr.mxu0 %v677
    %1283 = vmatpush1.msra.mxu0 %v676
    %1284 = vmatprep.subr.mxu0 %v685
    %1285 = vmatpush1.msra.mxu0 %v684
    %1286 = vmatprep.subr.mxu0 %v693
    %1287 = vmatpush1.msra.mxu0 %v692
    %1288 = vmatprep.subr.mxu0 %v701
    %1289 = vmatpush1.msra.mxu0 %v700
    %1290 = vmatprep.subr.mxu0 %v709
    %1291 = vmatpush1.msra.mxu0 %v708
    %1292 = vmatprep.subr.mxu0 %v717
    %1293 = vmatpush1.msra.mxu0 %v716
    %1294 = vmatprep.subr.mxu0 %v725
    %1295 = vmatpush1.msra.mxu0 %v724
    %1296 = vmatprep.subr.mxu0 %v733
    %1297 = vmatpush1.msra.mxu0 %v732
    %1298 = vmatprep.subr.mxu0 %v741
    %1299 = vmatpush1.msra.mxu0 %v740
    %1300 = vmatprep.subr.mxu0 %v749
    %1301 = vmatpush1.msra.mxu0 %v748
    %1302 = vmatprep.subr.mxu0 %v757
    %1303 = vmatpush1.msra.mxu0 %v756
    %1304 = vmatprep.subr.mxu0 %v765
    %1305 = vmatpush1.msra.mxu0 %v764
    %1306 = vmatprep.subr.mxu0 %v773
    %1307 = vmatpush1.msra.mxu0 %v772
    %1308 = vmatprep.subr.mxu0 %v781
    %1309 = vmatpush1.msra.mxu0 %v780
    %1310 = vmatprep.subr.mxu0 %v789
    %1311 = vmatpush1.msra.mxu0 %v788
    %1312 = vmatprep.subr.mxu0 %v797
    %1313 = vmatpush1.msra.mxu0 %v796
    %1314 = vmatprep.subr.mxu0 %v805
    %1315 = vmatpush1.msra.mxu0 %v804
    %1316 = vmatprep.subr.mxu0 %v813
    %1317 = vmatpush1.msra.mxu0 %v812
    %1318 = vmatprep.subr.mxu0 %v821
    %1319 = vmatpush1.msra.mxu0 %v820
    %1320 = vmatprep.subr.mxu0 %v829
    %1321 = vmatpush1.msra.mxu0 %v828
    %1322 = vmatprep.subr.mxu0 %v837
    %1323 = vmatpush1.msra.mxu0 %v836
    %1324 = vmatprep.subr.mxu0 %v845
    %1325 = vmatpush1.msra.mxu0 %v844
    %1326 = vmatprep.subr.mxu0 %v853
    %1327 = vmatpush1.msra.mxu0 %v852
    %1328 = vmatprep.subr.mxu0 %v861
    %1329 = vmatpush1.msra.mxu0 %v860
    %1330 = vmatprep.mubr.f32.mxu0 %v1116
    %1331 = vmatmul.mubr.f32.gmra.mrb[0].mxu0 %v1108
    %v1332 = vpop.f32.mrb[0].mxu0
    %v1333 = vadd.f32 %v1071, %v1332
    %v1334 = vpop.f32.mrb[0].mxu0
    %v1335 = vadd.f32 %v1075, %v1334
    %1336 = vdwg.mxu0
    %1337 = vmatprep.subr.mxu0 %v869
    %1338 = vmatpush1.msra.mxu0 %v868
    %1339 = vmatprep.subr.mxu0 %v877
    %1340 = vmatpush1.msra.mxu0 %v876
    %1341 = vmatprep.subr.mxu0 %v885
    %1342 = vmatpush1.msra.mxu0 %v884
    %1343 = vmatprep.subr.mxu0 %v893
    %1344 = vmatpush1.msra.mxu0 %v892
    %1345 = vmatprep.subr.mxu0 %v901
    %1346 = vmatpush1.msra.mxu0 %v900
    %1347 = vmatprep.subr.mxu0 %v909
    %1348 = vmatpush1.msra.mxu0 %v908
    %1349 = vmatprep.subr.mxu0 %v917
    %1350 = vmatpush1.msra.mxu0 %v916
    %1351 = vmatprep.subr.mxu0 %v925
    %1352 = vmatpush1.msra.mxu0 %v924
    %1353 = vmatprep.subr.mxu0 %v933
    %1354 = vmatpush1.msra.mxu0 %v932
    %1355 = vmatprep.subr.mxu0 %v941
    %1356 = vmatpush1.msra.mxu0 %v940
    %1357 = vmatprep.subr.mxu0 %v949
    %1358 = vmatpush1.msra.mxu0 %v948
    %1359 = vmatprep.subr.mxu0 %v957
    %1360 = vmatpush1.msra.mxu0 %v956
    %1361 = vmatprep.subr.mxu0 %v965
    %1362 = vmatpush1.msra.mxu0 %v964
    %1363 = vmatprep.subr.mxu0 %v973
    %1364 = vmatpush1.msra.mxu0 %v972
    %1365 = vmatprep.subr.mxu0 %v981
    %1366 = vmatpush1.msra.mxu0 %v980
    %1367 = vmatprep.subr.mxu0 %v989
    %1368 = vmatpush1.msra.mxu0 %v988
    %1369 = vmatprep.subr.mxu0 %v997
    %1370 = vmatpush1.msra.mxu0 %v996
    %1371 = vmatprep.subr.mxu0 %v1005
    %1372 = vmatpush1.msra.mxu0 %v1004
    %1373 = vmatprep.subr.mxu0 %v1013
    %1374 = vmatpush1.msra.mxu0 %v1012
    %1375 = vmatprep.subr.mxu0 %v1021
    %1376 = vmatpush1.msra.mxu0 %v1020
    %1377 = vmatprep.subr.mxu0 %v1029
    %1378 = vmatpush1.msra.mxu0 %v1028
    %1379 = vmatprep.subr.mxu0 %v1037
    %1380 = vmatpush1.msra.mxu0 %v1036
    %1381 = vmatprep.subr.mxu0 %v1045
    %1382 = vmatpush1.msra.mxu0 %v1044
    %1383 = vmatprep.subr.mxu0 %v1053
    %1384 = vmatpush1.msra.mxu0 %v1052
    %1385 = vmatprep.subr.mxu0 0.0
    %1386 = vmatpush1.msra.mxu0 0.0
    %1387 = vmatprep.subr.mxu0 0.0
    %1388 = vmatpush1.msra.mxu0 0.0
    %1389 = vmatprep.subr.mxu0 0.0
    %1390 = vmatpush1.msra.mxu0 0.0
    %1391 = vmatprep.subr.mxu0 0.0
    %1392 = vmatpush1.msra.mxu0 0.0
    %1393 = vmatprep.subr.mxu0 0.0
    %1394 = vmatpush1.msra.mxu0 0.0
    %1395 = vmatprep.subr.mxu0 0.0
    %1396 = vmatpush1.msra.mxu0 0.0
    %1397 = vmatprep.subr.mxu0 0.0
    %1398 = vmatpush1.msra.mxu0 0.0
    %1399 = vmatprep.subr.mxu0 0.0
    %1400 = vmatpush1.msra.mxu0 0.0
    %1401 = vmatprep.mubr.f32.mxu0 %v1122
    %1402 = vmatmul.mubr.f32.gmra.mrb[0].mxu0 %v1115
    %v1403 = vpop.f32.mrb[0].mxu0
    %v1404 = vadd.f32 %v1333, %v1403
    %v1405 = vpop.f32.mrb[0].mxu0
    %v1406 = vadd.f32 %v1335, %v1405
    %1407 = vdwg.mxu0
    %1408 = vmatprep.subr.mxu0 %v615
    %1409 = vmatpush1.msra.mxu0 %v614
    %1410 = vmatprep.subr.mxu0 %v623
    %1411 = vmatpush1.msra.mxu0 %v622
    %1412 = vmatprep.subr.mxu0 %v631
    %1413 = vmatpush1.msra.mxu0 %v630
    %1414 = vmatprep.subr.mxu0 %v639
    %1415 = vmatpush1.msra.mxu0 %v638
    %1416 = vmatprep.subr.mxu0 %v647
    %1417 = vmatpush1.msra.mxu0 %v646
    %1418 = vmatprep.subr.mxu0 %v655
    %1419 = vmatpush1.msra.mxu0 %v654
    %1420 = vmatprep.subr.mxu0 %v663
    %1421 = vmatpush1.msra.mxu0 %v662
    %1422 = vmatprep.subr.mxu0 %v671
    %1423 = vmatpush1.msra.mxu0 %v670
    %1424 = vmatprep.subr.mxu0 %v679
    %1425 = vmatpush1.msra.mxu0 %v678
    %1426 = vmatprep.subr.mxu0 %v687
    %1427 = vmatpush1.msra.mxu0 %v686
    %1428 = vmatprep.subr.mxu0 %v695
    %1429 = vmatpush1.msra.mxu0 %v694
    %1430 = vmatprep.subr.mxu0 %v703
    %1431 = vmatpush1.msra.mxu0 %v702
    %1432 = vmatprep.subr.mxu0 %v711
    %1433 = vmatpush1.msra.mxu0 %v710
    %1434 = vmatprep.subr.mxu0 %v719
    %1435 = vmatpush1.msra.mxu0 %v718
    %1436 = vmatprep.subr.mxu0 %v727
    %1437 = vmatpush1.msra.mxu0 %v726
    %1438 = vmatprep.subr.mxu0 %v735
    %1439 = vmatpush1.msra.mxu0 %v734
    %1440 = vmatprep.subr.mxu0 %v743
    %1441 = vmatpush1.msra.mxu0 %v742
    %1442 = vmatprep.subr.mxu0 %v751
    %1443 = vmatpush1.msra.mxu0 %v750
    %1444 = vmatprep.subr.mxu0 %v759
    %1445 = vmatpush1.msra.mxu0 %v758
    %1446 = vmatprep.subr.mxu0 %v767
    %1447 = vmatpush1.msra.mxu0 %v766
    %1448 = vmatprep.subr.mxu0 %v775
    %1449 = vmatpush1.msra.mxu0 %v774
    %1450 = vmatprep.subr.mxu0 %v783
    %1451 = vmatpush1.msra.mxu0 %v782
    %1452 = vmatprep.subr.mxu0 %v791
    %1453 = vmatpush1.msra.mxu0 %v790
    %1454 = vmatprep.subr.mxu0 %v799
    %1455 = vmatpush1.msra.mxu0 %v798
    %1456 = vmatprep.subr.mxu0 %v807
    %1457 = vmatpush1.msra.mxu0 %v806
    %1458 = vmatprep.subr.mxu0 %v815
    %1459 = vmatpush1.msra.mxu0 %v814
    %1460 = vmatprep.subr.mxu0 %v823
    %1461 = vmatpush1.msra.mxu0 %v822
    %1462 = vmatprep.subr.mxu0 %v831
    %1463 = vmatpush1.msra.mxu0 %v830
    %1464 = vmatprep.subr.mxu0 %v839
    %1465 = vmatpush1.msra.mxu0 %v838
    %1466 = vmatprep.subr.mxu0 %v847
    %1467 = vmatpush1.msra.mxu0 %v846
    %1468 = vmatprep.subr.mxu0 %v855
    %1469 = vmatpush1.msra.mxu0 %v854
    %1470 = vmatprep.subr.mxu0 %v863
    %1471 = vmatpush1.msra.mxu0 %v862
    %1472 = vmatprep.mubr.f32.mxu0 %v1116
    %1473 = vmatmul.mubr.f32.gmra.mrb[0].mxu0 %v1108
    %v1474 = vpop.f32.mrb[0].mxu0
    %v1475 = vadd.f32 %v1079, %v1474
    %v1476 = vpop.f32.mrb[0].mxu0
    %v1477 = vadd.f32 %v1083, %v1476
    %1478 = vdwg.mxu0
    %1479 = vmatprep.subr.mxu0 %v871
    %1480 = vmatpush1.msra.mxu0 %v870
    %1481 = vmatprep.subr.mxu0 %v879
    %1482 = vmatpush1.msra.mxu0 %v878
    %1483 = vmatprep.subr.mxu0 %v887
    %1484 = vmatpush1.msra.mxu0 %v886
    %1485 = vmatprep.subr.mxu0 %v895
    %1486 = vmatpush1.msra.mxu0 %v894
    %1487 = vmatprep.subr.mxu0 %v903
    %1488 = vmatpush1.msra.mxu0 %v902
    %1489 = vmatprep.subr.mxu0 %v911
    %1490 = vmatpush1.msra.mxu0 %v910
    %1491 = vmatprep.subr.mxu0 %v919
    %1492 = vmatpush1.msra.mxu0 %v918
    %1493 = vmatprep.subr.mxu0 %v927
    %1494 = vmatpush1.msra.mxu0 %v926
    %1495 = vmatprep.subr.mxu0 %v935
    %1496 = vmatpush1.msra.mxu0 %v934
    %1497 = vmatprep.subr.mxu0 %v943
    %1498 = vmatpush1.msra.mxu0 %v942
    %1499 = vmatprep.subr.mxu0 %v951
    %1500 = vmatpush1.msra.mxu0 %v950
    %1501 = vmatprep.subr.mxu0 %v959
    %1502 = vmatpush1.msra.mxu0 %v958
    %1503 = vmatprep.subr.mxu0 %v967
    %1504 = vmatpush1.msra.mxu0 %v966
    %1505 = vmatprep.subr.mxu0 %v975
    %1506 = vmatpush1.msra.mxu0 %v974
    %1507 = vmatprep.subr.mxu0 %v983
    %1508 = vmatpush1.msra.mxu0 %v982
    %1509 = vmatprep.subr.mxu0 %v991
    %1510 = vmatpush1.msra.mxu0 %v990
    %1511 = vmatprep.subr.mxu0 %v999
    %1512 = vmatpush1.msra.mxu0 %v998
    %1513 = vmatprep.subr.mxu0 %v1007
    %1514 = vmatpush1.msra.mxu0 %v1006
    %1515 = vmatprep.subr.mxu0 %v1015
    %1516 = vmatpush1.msra.mxu0 %v1014
    %1517 = vmatprep.subr.mxu0 %v1023
    %1518 = vmatpush1.msra.mxu0 %v1022
    %1519 = vmatprep.subr.mxu0 %v1031
    %1520 = vmatpush1.msra.mxu0 %v1030
    %1521 = vmatprep.subr.mxu0 %v1039
    %1522 = vmatpush1.msra.mxu0 %v1038
    %1523 = vmatprep.subr.mxu0 %v1047
    %1524 = vmatpush1.msra.mxu0 %v1046
    %1525 = vmatprep.subr.mxu0 %v1055
    %1526 = vmatpush1.msra.mxu0 %v1054
    %1527 = vmatprep.subr.mxu0 0.0
    %1528 = vmatpush1.msra.mxu0 0.0
    %1529 = vmatprep.subr.mxu0 0.0
    %1530 = vmatpush1.msra.mxu0 0.0
    %1531 = vmatprep.subr.mxu0 0.0
    %1532 = vmatpush1.msra.mxu0 0.0
    %1533 = vmatprep.subr.mxu0 0.0
    %1534 = vmatpush1.msra.mxu0 0.0
    %1535 = vmatprep.subr.mxu0 0.0
    %1536 = vmatpush1.msra.mxu0 0.0
    %1537 = vmatprep.subr.mxu0 0.0
    %1538 = vmatpush1.msra.mxu0 0.0
    %1539 = vmatprep.subr.mxu0 0.0
    %1540 = vmatpush1.msra.mxu0 0.0
    %1541 = vmatprep.subr.mxu0 0.0
    %1542 = vmatpush1.msra.mxu0 0.0
    %1543 = vmatprep.mubr.f32.mxu0 %v1122
    %1544 = vmatmul.mubr.f32.gmra.mrb[0].mxu0 %v1115
    %v1545 = vpop.f32.mrb[0].mxu0
    %v1546 = vadd.f32 %v1475, %v1545
    %v1547 = vpop.f32.mrb[0].mxu0
    %v1548 = vadd.f32 %v1477, %v1547
    %1549 = vdwg.mxu0
    %1550 = vmatprep.subr.mxu0 %v617
    %1551 = vmatpush1.msra.mxu0 %v616
    %1552 = vmatprep.subr.mxu0 %v625
    %1553 = vmatpush1.msra.mxu0 %v624
    %1554 = vmatprep.subr.mxu0 %v633
    %1555 = vmatpush1.msra.mxu0 %v632
    %1556 = vmatprep.subr.mxu0 %v641
    %1557 = vmatpush1.msra.mxu0 %v640
    %1558 = vmatprep.subr.mxu0 %v649
    %1559 = vmatpush1.msra.mxu0 %v648
    %1560 = vmatprep.subr.mxu0 %v657
    %1561 = vmatpush1.msra.mxu0 %v656
    %1562 = vmatprep.subr.mxu0 %v665
    %1563 = vmatpush1.msra.mxu0 %v664
    %1564 = vmatprep.subr.mxu0 %v673
    %1565 = vmatpush1.msra.mxu0 %v672
    %1566 = vmatprep.subr.mxu0 %v681
    %1567 = vmatpush1.msra.mxu0 %v680
    %1568 = vmatprep.subr.mxu0 %v689
    %1569 = vmatpush1.msra.mxu0 %v688
    %1570 = vmatprep.subr.mxu0 %v697
    %1571 = vmatpush1.msra.mxu0 %v696
    %1572 = vmatprep.subr.mxu0 %v705
    %1573 = vmatpush1.msra.mxu0 %v704
    %1574 = vmatprep.subr.mxu0 %v713
    %1575 = vmatpush1.msra.mxu0 %v712
    %1576 = vmatprep.subr.mxu0 %v721
    %1577 = vmatpush1.msra.mxu0 %v720
    %1578 = vmatprep.subr.mxu0 %v729
    %1579 = vmatpush1.msra.mxu0 %v728
    %1580 = vmatprep.subr.mxu0 %v737
    %1581 = vmatpush1.msra.mxu0 %v736
    %1582 = vmatprep.subr.mxu0 %v745
    %1583 = vmatpush1.msra.mxu0 %v744
    %1584 = vmatprep.subr.mxu0 %v753
    %1585 = vmatpush1.msra.mxu0 %v752
    %1586 = vmatprep.subr.mxu0 %v761
    %1587 = vmatpush1.msra.mxu0 %v760
    %1588 = vmatprep.subr.mxu0 %v769
    %1589 = vmatpush1.msra.mxu0 %v768
    %1590 = vmatprep.subr.mxu0 %v777
    %1591 = vmatpush1.msra.mxu0 %v776
    %1592 = vmatprep.subr.mxu0 %v785
    %1593 = vmatpush1.msra.mxu0 %v784
    %1594 = vmatprep.subr.mxu0 %v793
    %1595 = vmatpush1.msra.mxu0 %v792
    %1596 = vmatprep.subr.mxu0 %v801
    %1597 = vmatpush1.msra.mxu0 %v800
    %1598 = vmatprep.subr.mxu0 %v809
    %1599 = vmatpush1.msra.mxu0 %v808
    %1600 = vmatprep.subr.mxu0 %v817
    %1601 = vmatpush1.msra.mxu0 %v816
    %1602 = vmatprep.subr.mxu0 %v825
    %1603 = vmatpush1.msra.mxu0 %v824
    %1604 = vmatprep.subr.mxu0 %v833
    %1605 = vmatpush1.msra.mxu0 %v832
    %1606 = vmatprep.subr.mxu0 %v841
    %1607 = vmatpush1.msra.mxu0 %v840
    %1608 = vmatprep.subr.mxu0 %v849
    %1609 = vmatpush1.msra.mxu0 %v848
    %1610 = vmatprep.subr.mxu0 %v857
    %1611 = vmatpush1.msra.mxu0 %v856
    %1612 = vmatprep.subr.mxu0 %v865
    %1613 = vmatpush1.msra.mxu0 %v864
    %1614 = vmatprep.mubr.f32.mxu0 %v1116
    %1615 = vmatmul.mubr.f32.gmra.mrb[0].mxu0 %v1108
    %v1616 = vpop.f32.mrb[0].mxu0
    %v1617 = vadd.f32 %v1087, %v1616
    %v1618 = vpop.f32.mrb[0].mxu0
    %v1619 = vadd.f32 %v1091, %v1618
    %1620 = vdwg.mxu0
    %1621 = vmatprep.subr.mxu0 %v873
    %1622 = vmatpush1.msra.mxu0 %v872
    %1623 = vmatprep.subr.mxu0 %v881
    %1624 = vmatpush1.msra.mxu0 %v880
    %1625 = vmatprep.subr.mxu0 %v889
    %1626 = vmatpush1.msra.mxu0 %v888
    %1627 = vmatprep.subr.mxu0 %v897
    %1628 = vmatpush1.msra.mxu0 %v896
    %1629 = vmatprep.subr.mxu0 %v905
    %1630 = vmatpush1.msra.mxu0 %v904
    %1631 = vmatprep.subr.mxu0 %v913
    %1632 = vmatpush1.msra.mxu0 %v912
    %1633 = vmatprep.subr.mxu0 %v921
    %1634 = vmatpush1.msra.mxu0 %v920
    %1635 = vmatprep.subr.mxu0 %v929
    %1636 = vmatpush1.msra.mxu0 %v928
    %1637 = vmatprep.subr.mxu0 %v937
    %1638 = vmatpush1.msra.mxu0 %v936
    %1639 = vmatprep.subr.mxu0 %v945
    %1640 = vmatpush1.msra.mxu0 %v944
    %1641 = vmatprep.subr.mxu0 %v953
    %1642 = vmatpush1.msra.mxu0 %v952
    %1643 = vmatprep.subr.mxu0 %v961
    %1644 = vmatpush1.msra.mxu0 %v960
    %1645 = vmatprep.subr.mxu0 %v969
    %1646 = vmatpush1.msra.mxu0 %v968
    %1647 = vmatprep.subr.mxu0 %v977
    %1648 = vmatpush1.msra.mxu0 %v976
    %1649 = vmatprep.subr.mxu0 %v985
    %1650 = vmatpush1.msra.mxu0 %v984
    %1651 = vmatprep.subr.mxu0 %v993
    %1652 = vmatpush1.msra.mxu0 %v992
    %1653 = vmatprep.subr.mxu0 %v1001
    %1654 = vmatpush1.msra.mxu0 %v1000
    %1655 = vmatprep.subr.mxu0 %v1009
    %1656 = vmatpush1.msra.mxu0 %v1008
    %1657 = vmatprep.subr.mxu0 %v1017
    %1658 = vmatpush1.msra.mxu0 %v1016
    %1659 = vmatprep.subr.mxu0 %v1025
    %1660 = vmatpush1.msra.mxu0 %v1024
    %1661 = vmatprep.subr.mxu0 %v1033
    %1662 = vmatpush1.msra.mxu0 %v1032
    %1663 = vmatprep.subr.mxu0 %v1041
    %1664 = vmatpush1.msra.mxu0 %v1040
    %1665 = vmatprep.subr.mxu0 %v1049
    %1666 = vmatpush1.msra.mxu0 %v1048
    %1667 = vmatprep.subr.mxu0 %v1057
    %1668 = vmatpush1.msra.mxu0 %v1056
    %1669 = vmatprep.subr.mxu0 0.0
    %1670 = vmatpush1.msra.mxu0 0.0
    %1671 = vmatprep.subr.mxu0 0.0
    %1672 = vmatpush1.msra.mxu0 0.0
    %1673 = vmatprep.subr.mxu0 0.0
    %1674 = vmatpush1.msra.mxu0 0.0
    %1675 = vmatprep.subr.mxu0 0.0
    %1676 = vmatpush1.msra.mxu0 0.0
    %1677 = vmatprep.subr.mxu0 0.0
    %1678 = vmatpush1.msra.mxu0 0.0
    %1679 = vmatprep.subr.mxu0 0.0
    %1680 = vmatpush1.msra.mxu0 0.0
    %1681 = vmatprep.subr.mxu0 0.0
    %1682 = vmatpush1.msra.mxu0 0.0
    %1683 = vmatprep.subr.mxu0 0.0
    %1684 = vmatpush1.msra.mxu0 0.0
    %1685 = vmatprep.mubr.f32.mxu0 %v1122
    %1686 = vmatmul.mubr.f32.gmra.mrb[0].mxu0 %v1115
    %v1687 = vpop.f32.mrb[0].mxu0
    %v1688 = vadd.f32 %v1617, %v1687
    %v1689 = vpop.f32.mrb[0].mxu0
    %v1690 = vadd.f32 %v1619, %v1689
    %1691 = vdwg.mxu0
    %v1692 = vmax.f32 %v1262, 0.0
    %v1693 = vmax.f32 %v1264, 0.0
    %v1694 = vmax.f32 %v1404, 0.0
    %v1695 = vmax.f32 %v1406, 0.0
    %v1696 = vmax.f32 %v1546, 0.0
    %v1697 = vmax.f32 %v1548, 0.0
    %v1698 = vmax.f32 %v1688, 0.0
    %v1699 = vmax.f32 %v1690, 0.0
    %v1708 = vcombine.low %v1692, %v1693
    %v1709 = vcombine.low %v1694, %v1695
    %v1711 = vunpack.c.l.s4 1983009808
    %v1712 = vunpack.c.0.s8 %v1711
    %v1713 = vlaneseq
    %v1714 = vshrl.u32 %v1713, 7
    %v1715 = vsub.s32 %v1712, %v1714
    %v1716 = vrot.slane %v1708, %v1715
    %v1718 = vunpack.c.l.s4 1983009808
    %v1719 = vunpack.c.0.s8 %v1718
    %v1720 = vlaneseq
    %v1721 = vshrl.u32 %v1720, 7
    %v1722 = vsub.s32 %v1719, %v1721
    %v1723 = vrot.slane %v1709, %v1722
    %v1724 = vcombine.low %v1716, %v1723
    %v1725 = vcombine.low %v1696, %v1697
    %v1726 = vcombine.low %v1698, %v1699
    %v1728 = vunpack.c.l.s4 1983009808
    %v1729 = vunpack.c.0.s8 %v1728
    %v1730 = vlaneseq
    %v1731 = vshrl.u32 %v1730, 7
    %v1732 = vsub.s32 %v1729, %v1731
    %v1733 = vrot.slane %v1725, %v1732
    %v1735 = vunpack.c.l.s4 1983009808
    %v1736 = vunpack.c.0.s8 %v1735
    %v1737 = vlaneseq
    %v1738 = vshrl.u32 %v1737, 7
    %v1739 = vsub.s32 %v1736, %v1738
    %v1740 = vrot.slane %v1726, %v1739
    %v1741 = vcombine.low %v1733, %v1740
    %1744 = vst [vmem:[#allocation12] sm:$0xff] %v1724
    %vm1745 = vmor %vm604, %vm589
    %vm1746 = vcmask 1045508
    %vm1747 = vmor %vm1746, %vm1745
    %vm1748 = vcmask 850950
    %vm1749 = vmor %vm1748, %vm1747
    %1750 = vst.msk [vmem:[#allocation12 + $0x8] sm:$0xff] %vm1749, %v1741
    // Predicated region
    $region38: #{my_model_forward.1} parent=1 // pred_check
      _
    $region39: #{my_model_forward.1} parent=1 // pred_check_branch
      %1752 = sbr.rel (0) target = $region41
    $region40: #{my_model_forward.1} parent=1 // pred_region
      %s1754 = ssub.s32 256, 256
      %1755 = vsyncadd [#allocation5], %s1754
      %s1757 = sshll.u32 [#allocation12], 4
      %s1758 = int_to_ptr.vmem [resolvable:$true] %s1757
      %1760 = dma.vmem_to_hbm [thread:$0]  %s1758, 256, %s5, [#allocation5]
    $region41: #{my_model_forward.1} parent=1 // pred_fallthru
      _
    // Predicated region
    $region42: #{my_model_forward.1} parent=1 // pred_check
      _
    $region43: #{my_model_forward.1} parent=1 // pred_check_branch
      %1762 = sbr.rel (0) target = $region45
    $region44: #{my_model_forward.1} parent=1 // pred_region
      %1763 = dma.done [#allocation5], 256
    $region45: #{my_model_forward.1} parent=1 // pred_fallthru
      _
    %1764 = vsyncpa [#allocation4], 1
    %1765 = vsyncpa [#allocation11], 1
    %1766 = vsyncpa [#allocation5], 1
    %1767 = vsyncpa [#allocation6], 1
    %1768 = vsyncpa [#allocation8], 1

</llo_original>
